<compile_context>
chip_gen: v7x
topology: tpu7x:2x2x1
jax: 0.10.0
libtpu: 0.0.40
codegen_flags: <defaults>
</compile_context>

<pallas_src>
import functools
import math

import jax
import jax.numpy as jnp
from jax.experimental import pallas as pl
from jax.experimental.pallas import tpu as pltpu


def _attention_pool_kernel(x_ref, mean_ref, wkvq_ref, bkvq_ref, wc_ref, bc_ref,
                           r_ref, rt_ref, e_ref, et_ref, o_ref, *, num_heads):
    """One batch block.

    x_ref    : (B*HW, C)  spatial tokens (pos already added), compute dtype
    mean_ref : (B, C)     mean token (pos[0] already added), compute dtype
    wkvq_ref : (C, 3C)    [Wk^T | Wv^T | Wq^T * 1/sqrt(D)]
    bkvq_ref : (1, 3C)    [bk   | bv   | bq   * 1/sqrt(D)]  (f32)
    wc_ref   : (C, O_pad) Wc^T, output dim zero-padded to a 128 multiple
    bc_ref   : (1, O_pad) f32
    r_ref    : (C, H)     one-hot "channel c belongs to head h" (lane -> head)
    rt_ref   : (H, C)     transpose of R                        (head -> lane)
    e_ref    : (B*HW, B)  one-hot "token row r belongs to batch b"
    et_ref   : (B, B*HW)  transpose of E
    o_ref    : (B, O_pad) pooled output (lane-dense), f32
    """
    B, C = mean_ref.shape
    BHW = x_ref.shape[0]
    HW = BHW // B
    H = num_heads
    f32 = jnp.float32
    cdt = x_ref.dtype                      # MXU operand dtype (normally bf16)

    w_kvq = wkvq_ref[...]
    b_kvq = bkvq_ref[...]

    # ---- projections: MXU operands in compute dtype, f32 accumulation -------
    # Spatial tokens: one packed K/V matmul on the 8-aligned (B*HW, C) slab.
    kv_sp = (jnp.dot(x_ref[...], w_kvq[:, :2 * C], preferred_element_type=f32)
             + b_kvq[:, :2 * C]).astype(cdt)                       # (B*HW, 2C)
    k_sp = kv_sp[:, :C]
    v_sp = kv_sp[:, C:]

    # Mean token: single merged [K | V | Q] matmul (q-scale folded into weights).
    kvq_mn = (jnp.dot(mean_ref[...], w_kvq, preferred_element_type=f32)
              + b_kvq)                                             # (B, 3C) f32
    k_mn = kvq_mn[:, :C]
    v_mn = kvq_mn[:, C:2 * C]
    q = kvq_mn[:, 2 * C:]                                          # scale already applied

    # ---- per-head scores via one-hot reduce (no head slicing / big reshapes) -
    q_tok = jnp.dot(e_ref[...], q.astype(cdt),
                    preferred_element_type=f32).astype(cdt)        # (B*HW, C) q -> tokens
    s_sp = jnp.dot(q_tok * k_sp, r_ref[...],
                   preferred_element_type=f32)                     # (B*HW, H)
    s_mn = jnp.dot((q * k_mn).astype(cdt), r_ref[...],
                   preferred_element_type=f32)                     # (B, H)

    # ---- softmax over the HW + 1 keys per (batch, head), f32 throughout ------
    s3 = s_sp.reshape(B, HW, H)                                    # small H-lane array
    m = jnp.maximum(jnp.max(s3, axis=1), s_mn)                     # (B, H)
    p3 = jnp.exp(s3 - m[:, None, :])                               # (B, HW, H)
    p_mn = jnp.exp(s_mn - m)                                       # (B, H)
    denom = jnp.sum(p3, axis=1) + p_mn                             # (B, H)
    inv = pl.reciprocal(denom, approx=False)                       # exact: torch parity

    # ---- weighted values: head->lane broadcast + per-batch token reduce ------
    p_tok = jnp.dot(p3.reshape(BHW, H).astype(cdt), rt_ref[...],
                    preferred_element_type=f32).astype(cdt)        # (B*HW, C)
    attn = jnp.dot(et_ref[...], p_tok * v_sp,
                   preferred_element_type=f32)                     # (B, C) f32
    rt_f32 = rt_ref[...].astype(f32)
    attn = (attn + jnp.dot(p_mn, rt_f32, preferred_element_type=f32) * v_mn) \
        * jnp.dot(inv, rt_f32, preferred_element_type=f32)

    # ---- output projection (lane-dense padded O) ------------------------------
    out = (jnp.dot(attn.astype(cdt), wc_ref[...], preferred_element_type=f32)
           + bc_ref[...])
    o_ref[...] = out.astype(o_ref.dtype)


def attention_pool2d(x_nchw, params, num_heads, *, block_b=32,
                     compute_dtype=jnp.bfloat16,
                     vmem_limit_bytes=48 * 1024 * 1024):
    """x_nchw: (N, C, H, W) -> (N, output_dim) float32 (AttentionPool2d.forward)."""
    N, C, Hs, Ws = x_nchw.shape
    HW = Hs * Ws
    O = params["wc"].shape[0]
    H = num_heads
    assert C % H == 0
    D = C // H

    # ---- batch blocking (sweep block_b per generation: ~32-64 v5e/v6e, 16-32 v7x)
    B = min(block_b, N)
    if B < N:                         # multi-block: keep batch tiles sublane-aligned
        B = (B + 7) // 8 * 8
        if B >= N:
            B = N
    n_blocks = pl.cdiv(N, B)
    N_pad = n_blocks * B

    # ---- host/XLA prep: token layout, f32 mean, pos add (fuses with transpose)
    pos = params["pos"].astype(jnp.float32)                                  # (HW+1, C)
    x_t = x_nchw.astype(jnp.float32).reshape(N, C, HW).transpose(0, 2, 1)    # (N, HW, C)
    mean_tok = jnp.mean(x_t, axis=1) + pos[:1]                               # (N, C) f32
    x_sp = x_t + pos[1:][None, :, :]                                         # (N, HW, C)

    x_flat = x_sp.reshape(N * HW, C).astype(compute_dtype)                   # (N*HW, C)
    mean_c = mean_tok.astype(compute_dtype)
    if N_pad != N:
        x_flat = jnp.pad(x_flat, ((0, (N_pad - N) * HW), (0, 0)))
        mean_c = jnp.pad(mean_c, ((0, N_pad - N), (0, 0)))

    # ---- weights: (in, out) layout, packed [K|V|Q], q-scale folded in ---------
    scale = 1.0 / math.sqrt(D)
    w_kvq = jnp.concatenate(
        [params["wk"].T, params["wv"].T, params["wq"].T * scale],
        axis=1).astype(compute_dtype)                                        # (C, 3C)
    b_kvq = jnp.concatenate(
        [params["bk"], params["bv"], params["bq"] * scale],
        axis=1).astype(jnp.float32)                                          # (1, 3C)
    O_pad = -(-O // 128) * 128                                               # lane-dense out
    wc_t = jnp.pad(params["wc"].T, ((0, 0), (0, O_pad - O))).astype(compute_dtype)
    bc = jnp.pad(params["bc"], ((0, 0), (0, O_pad - O))).astype(jnp.float32)

    # Loop-invariant one-hot helpers, precomputed on the host (not per grid step).
    r = (jnp.arange(C)[:, None] // D == jnp.arange(H)[None, :]).astype(compute_dtype)   # (C, H)
    rt = jnp.transpose(r)                                                                # (H, C)
    e = (jnp.arange(B * HW)[:, None] // HW
         == jnp.arange(B)[None, :]).astype(compute_dtype)                               # (B*HW, B)
    et = jnp.transpose(e)                                                                # (B, B*HW)

    kernel = functools.partial(_attention_pool_kernel, num_heads=num_heads)

    # TODO(synk): for very large C (>= 4096) add a C-reduction grid axis ("arbitrary")
    # with f32 VMEM accumulators so per-step weight tiles stay well under v7x's 64 MiB/TC.
    def build(single_buffer_consts):
        if single_buffer_consts:
            # Constant-index operands never change block -> single-buffer them
            # (halves resident weight VMEM; matters at CLIP scale, esp. v7x).
            def cspec(shape):
                return pl.BlockSpec(shape, lambda n: (0, 0),
                                    pipeline_mode=pl.Buffered(1))
        else:
            def cspec(shape):
                return pl.BlockSpec(shape, lambda n: (0, 0))
        return pl.pallas_call(
            kernel,
            out_shape=jax.ShapeDtypeStruct((N_pad, O_pad), jnp.float32),
            grid=(n_blocks,),
            in_specs=[
                pl.BlockSpec((B * HW, C), lambda n: (n, 0)),   # spatial tokens (flat)
                pl.BlockSpec((B, C), lambda n: (n, 0)),        # mean tokens
                cspec((C, 3 * C)),                             # [Wk^T | Wv^T | Wq^T*s]
                cspec((1, 3 * C)),                             # packed bias
                cspec((C, O_pad)),                             # Wc^T (padded)
                cspec((1, O_pad)),                             # bc (padded)
                cspec((C, H)),                                 # R
                cspec((H, C)),                                 # Rt
                cspec((B * HW, B)),                            # E
                cspec((B, B * HW)),                            # Et
            ],
            out_specs=pl.BlockSpec((B, O_pad), lambda n: (n, 0)),
            compiler_params=pltpu.CompilerParams(
                dimension_semantics=("parallel",),
                vmem_limit_bytes=vmem_limit_bytes),
        )

    args = (x_flat, mean_c, w_kvq, b_kvq, wc_t, bc, r, rt, e, et)
    try:
        out = build(True)(*args)
    except Exception:
        # pipeline_mode=pl.Buffered(1) unavailable on this JAX version/backend;
        # fall back to default (double-buffered) constant operands.
        out = build(False)(*args)
    return out[:N, :O]


def _reference(x_nchw, params, num_heads):
    """Pure-JAX f32 reference mirroring F.multi_head_attention_forward semantics."""
    N, C, H, W = x_nchw.shape
    x = x_nchw.reshape(N, C, H * W).transpose(2, 0, 1)           # (HW, N, C)
    x = jnp.concatenate([x.mean(axis=0, keepdims=True), x], 0)   # (L, N, C)
    x = x + params["pos"][:, None, :]
    L = x.shape[0]
    D = C // num_heads
    q = x[:1] @ params["wq"].T + params["bq"]                    # (1, N, C)
    k = x @ params["wk"].T + params["bk"]                        # (L, N, C)
    v = x @ params["wv"].T + params["bv"]
    qh = q.reshape(1, N, num_heads, D).transpose(1, 2, 0, 3)     # (N, h, 1, D)
    kh = k.reshape(L, N, num_heads, D).transpose(1, 2, 0, 3)     # (N, h, L, D)
    vh = v.reshape(L, N, num_heads, D).transpose(1, 2, 0, 3)
    s = jnp.einsum("nhqd,nhkd->nhqk", qh, kh) / math.sqrt(D)
    p = jax.nn.softmax(s, axis=-1)
    o = jnp.einsum("nhqk,nhkd->nhqd", p, vh)                     # (N, h, 1, D)
    o = o.transpose(0, 2, 1, 3).reshape(N, C)
    return o @ params["wc"].T + params["bc"][0]


def make_params(key, spacial_dim, embed_dim, output_dim):
    ks = jax.random.split(key, 9)
    L = spacial_dim ** 2 + 1
    scale = 0.05
    return {
        "pos": jax.random.normal(ks[0], (L, embed_dim), jnp.float32) / math.sqrt(embed_dim),
        "wq": jax.random.normal(ks[1], (embed_dim, embed_dim), jnp.float32) * scale,
        "bq": jax.random.normal(ks[2], (1, embed_dim), jnp.float32) * scale,
        "wk": jax.random.normal(ks[3], (embed_dim, embed_dim), jnp.float32) * scale,
        "bk": jax.random.normal(ks[4], (1, embed_dim), jnp.float32) * scale,
        "wv": jax.random.normal(ks[5], (embed_dim, embed_dim), jnp.float32) * scale,
        "bv": jax.random.normal(ks[6], (1, embed_dim), jnp.float32) * scale,
        "wc": jax.random.normal(ks[7], (output_dim, embed_dim), jnp.float32) * scale,
        "bc": jax.random.normal(ks[8], (1, output_dim), jnp.float32) * scale,
    }


if __name__ == "__main__":
    batch = 2
    spacial_dim = 4          # H = W = 4 -> HW = 16, L = 17
    embed_dim = 32
    num_heads = 4            # head_dim = 8
    output_dim = 16

    key = jax.random.PRNGKey(0)
    k_x, k_p = jax.random.split(key)
    x = jax.random.normal(k_x, (batch, embed_dim, spacial_dim, spacial_dim), jnp.float32)
    params = make_params(k_p, spacial_dim, embed_dim, output_dim)

    out = attention_pool2d(x, params, num_heads)
    out = jax.block_until_ready(out)

    ref = _reference(x, params, num_heads)
    assert out.shape == (batch, output_dim), out.shape
    assert jnp.all(jnp.isfinite(out))
    # bf16 MXU operands (f32 accumulation) vs the f32 reference -> relaxed tolerance.
    err = jnp.max(jnp.abs(out - ref))
    assert jnp.allclose(out, ref, rtol=2e-2, atol=3e-3), err

    print("KERNEL_OK")
</pallas_src>

<mosaic_0001>
module attributes {stable_mosaic.version = 11 : i64} {
  func.func @_attention_pool_kernel(%arg0: i32, %arg1: memref<32x32xbf16, #tpu.memory_space<vmem>>, %arg2: memref<2x32xbf16, #tpu.memory_space<vmem>>, %arg3: memref<32x96xbf16, #tpu.memory_space<vmem>>, %arg4: memref<1x96xf32, #tpu.memory_space<vmem>>, %arg5: memref<32x128xbf16, #tpu.memory_space<vmem>>, %arg6: memref<1x128xf32, #tpu.memory_space<vmem>>, %arg7: memref<32x4xbf16, #tpu.memory_space<vmem>>, %arg8: memref<4x32xbf16, #tpu.memory_space<vmem>>, %arg9: memref<32x2xbf16, #tpu.memory_space<vmem>>, %arg10: memref<2x32xbf16, #tpu.memory_space<vmem>>, %arg11: memref<2x128xf32, #tpu.memory_space<vmem>>) attributes {dimension_semantics = [#tpu.dimension_semantics<parallel>], iteration_bounds = array<i64: 1>, scalar_prefetch = 0 : i64, scratch_operands = 0 : i64, tpu.core_type = #tpu.core_type<tc>, window_params = [{transform_indices = @transform_0, window_bounds = array<i64: 32, 32>}, {transform_indices = @transform_1, window_bounds = array<i64: 2, 32>}, {pipeline_mode = #tpu.pipeline_mode<synchronous>, transform_indices = @transform_2, window_bounds = array<i64: 32, 96>}, {pipeline_mode = #tpu.pipeline_mode<synchronous>, transform_indices = @transform_3, window_bounds = array<i64: 1, 96>}, {pipeline_mode = #tpu.pipeline_mode<synchronous>, transform_indices = @transform_4, window_bounds = array<i64: 32, 128>}, {pipeline_mode = #tpu.pipeline_mode<synchronous>, transform_indices = @transform_5, window_bounds = array<i64: 1, 128>}, {pipeline_mode = #tpu.pipeline_mode<synchronous>, transform_indices = @transform_6, window_bounds = array<i64: 32, 4>}, {pipeline_mode = #tpu.pipeline_mode<synchronous>, transform_indices = @transform_7, window_bounds = array<i64: 4, 32>}, {pipeline_mode = #tpu.pipeline_mode<synchronous>, transform_indices = @transform_8, window_bounds = array<i64: 32, 2>}, {pipeline_mode = #tpu.pipeline_mode<synchronous>, transform_indices = @transform_9, window_bounds = array<i64: 2, 32>}, {transform_indices = @transform_10, window_bounds = array<i64: 2, 128>}]} {
    %c0 = arith.constant 0 : index
    %c0_0 = arith.constant 0 : index
    %0 = vector.load %arg3[%c0, %c0_0] : memref<32x96xbf16, #tpu.memory_space<vmem>>, vector<32x96xbf16>
    %c0_1 = arith.constant 0 : index
    %c0_2 = arith.constant 0 : index
    %1 = vector.load %arg4[%c0_1, %c0_2] : memref<1x96xf32, #tpu.memory_space<vmem>>, vector<1x96xf32>
    %c0_3 = arith.constant 0 : index
    %c0_4 = arith.constant 0 : index
    %2 = vector.load %arg1[%c0_3, %c0_4] : memref<32x32xbf16, #tpu.memory_space<vmem>>, vector<32x32xbf16>
    %3 = vector.extract_strided_slice %0 {offsets = [0, 0], sizes = [32, 64], strides = [1, 1]} : vector<32x96xbf16> to vector<32x64xbf16>
    %cst = arith.constant dense<0.000000e+00> : vector<32x64xf32>
    %4 = tpu.matmul %2, %3, %cst {dimension_numbers = #tpu.dot_dimension_numbers<[1], [0], [0], [1], [0, 0, 1, 1], [], []>} : vector<32x32xbf16>, vector<32x64xbf16>, vector<32x64xf32> -> vector<32x64xf32>
    %5 = vector.extract_strided_slice %1 {offsets = [0, 0], sizes = [1, 64], strides = [1, 1]} : vector<1x96xf32> to vector<1x64xf32>
    %6 = vector.broadcast %5 : vector<1x64xf32> to vector<32x64xf32>
    %7 = arith.addf %4, %6 : vector<32x64xf32>
    %8 = arith.truncf %7 : vector<32x64xf32> to vector<32x64xbf16>
    %9 = vector.extract_strided_slice %8 {offsets = [0, 0], sizes = [32, 32], strides = [1, 1]} : vector<32x64xbf16> to vector<32x32xbf16>
    %10 = vector.extract_strided_slice %8 {offsets = [0, 32], sizes = [32, 32], strides = [1, 1]} : vector<32x64xbf16> to vector<32x32xbf16>
    %c0_5 = arith.constant 0 : index
    %c0_6 = arith.constant 0 : index
    %11 = vector.load %arg2[%c0_5, %c0_6] : memref<2x32xbf16, #tpu.memory_space<vmem>>, vector<2x32xbf16>
    %cst_7 = arith.constant dense<0.000000e+00> : vector<2x96xf32>
    %12 = tpu.matmul %11, %0, %cst_7 {dimension_numbers = #tpu.dot_dimension_numbers<[1], [0], [0], [1], [0, 0, 1, 1], [], []>} : vector<2x32xbf16>, vector<32x96xbf16>, vector<2x96xf32> -> vector<2x96xf32>
    %13 = vector.broadcast %1 : vector<1x96xf32> to vector<2x96xf32>
    %14 = arith.addf %12, %13 : vector<2x96xf32>
    %15 = vector.extract_strided_slice %14 {offsets = [0, 0], sizes = [2, 32], strides = [1, 1]} : vector<2x96xf32> to vector<2x32xf32>
    %16 = vector.extract_strided_slice %14 {offsets = [0, 32], sizes = [2, 32], strides = [1, 1]} : vector<2x96xf32> to vector<2x32xf32>
    %17 = vector.extract_strided_slice %14 {offsets = [0, 64], sizes = [2, 32], strides = [1, 1]} : vector<2x96xf32> to vector<2x32xf32>
    %c0_8 = arith.constant 0 : index
    %c0_9 = arith.constant 0 : index
    %18 = vector.load %arg9[%c0_8, %c0_9] : memref<32x2xbf16, #tpu.memory_space<vmem>>, vector<32x2xbf16>
    %19 = arith.truncf %17 : vector<2x32xf32> to vector<2x32xbf16>
    %cst_10 = arith.constant dense<0.000000e+00> : vector<32x32xf32>
    %20 = tpu.matmul %18, %19, %cst_10 {dimension_numbers = #tpu.dot_dimension_numbers<[1], [0], [0], [1], [0, 0, 1, 1], [], []>} : vector<32x2xbf16>, vector<2x32xbf16>, vector<32x32xf32> -> vector<32x32xf32>
    %21 = arith.truncf %20 : vector<32x32xf32> to vector<32x32xbf16>
    %22 = arith.mulf %21, %9 : vector<32x32xbf16>
    %c0_11 = arith.constant 0 : index
    %c0_12 = arith.constant 0 : index
    %23 = vector.load %arg7[%c0_11, %c0_12] : memref<32x4xbf16, #tpu.memory_space<vmem>>, vector<32x4xbf16>
    %cst_13 = arith.constant dense<0.000000e+00> : vector<32x4xf32>
    %24 = tpu.matmul %22, %23, %cst_13 {dimension_numbers = #tpu.dot_dimension_numbers<[1], [0], [0], [1], [0, 0, 1, 1], [], []>} : vector<32x32xbf16>, vector<32x4xbf16>, vector<32x4xf32> -> vector<32x4xf32>
    %25 = arith.mulf %17, %15 : vector<2x32xf32>
    %26 = arith.truncf %25 : vector<2x32xf32> to vector<2x32xbf16>
    %c0_14 = arith.constant 0 : index
    %c0_15 = arith.constant 0 : index
    %27 = vector.load %arg7[%c0_14, %c0_15] : memref<32x4xbf16, #tpu.memory_space<vmem>>, vector<32x4xbf16>
    %cst_16 = arith.constant dense<0.000000e+00> : vector<2x4xf32>
    %28 = tpu.matmul %26, %27, %cst_16 {dimension_numbers = #tpu.dot_dimension_numbers<[1], [0], [0], [1], [0, 0, 1, 1], [], []>} : vector<2x32xbf16>, vector<32x4xbf16>, vector<2x4xf32> -> vector<2x4xf32>
    %29 = vector.shape_cast %24 : vector<32x4xf32> to vector<2x16x4xf32>
    %cst_17 = arith.constant dense<0xFF800000> : vector<2x4xf32>
    %30 = vector.multi_reduction <maximumf>, %29, %cst_17 [1] : vector<2x16x4xf32> to vector<2x4xf32>
    %31 = arith.maximumf %30, %28 : vector<2x4xf32>
    %32 = vector.shape_cast %31 : vector<2x4xf32> to vector<2x1x4xf32>
    %33 = vector.broadcast %32 : vector<2x1x4xf32> to vector<2x16x4xf32>
    %34 = arith.subf %29, %33 : vector<2x16x4xf32>
    %35 = math.exp %34 : vector<2x16x4xf32>
    %36 = arith.subf %28, %31 : vector<2x4xf32>
    %37 = math.exp %36 : vector<2x4xf32>
    %cst_18 = arith.constant dense<0.000000e+00> : vector<2x4xf32>
    %38 = vector.multi_reduction <add>, %35, %cst_18 [1] : vector<2x16x4xf32> to vector<2x4xf32>
    %39 = arith.addf %38, %37 : vector<2x4xf32>
    %40 = tpu.reciprocal %39 : vector<2x4xf32> -> vector<2x4xf32>
    %41 = vector.shape_cast %35 : vector<2x16x4xf32> to vector<32x4xf32>
    %42 = arith.truncf %41 : vector<32x4xf32> to vector<32x4xbf16>
    %c0_19 = arith.constant 0 : index
    %c0_20 = arith.constant 0 : index
    %43 = vector.load %arg8[%c0_19, %c0_20] : memref<4x32xbf16, #tpu.memory_space<vmem>>, vector<4x32xbf16>
    %cst_21 = arith.constant dense<0.000000e+00> : vector<32x32xf32>
    %44 = tpu.matmul %42, %43, %cst_21 {dimension_numbers = #tpu.dot_dimension_numbers<[1], [0], [0], [1], [0, 0, 1, 1], [], []>} : vector<32x4xbf16>, vector<4x32xbf16>, vector<32x32xf32> -> vector<32x32xf32>
    %45 = arith.truncf %44 : vector<32x32xf32> to vector<32x32xbf16>
    %c0_22 = arith.constant 0 : index
    %c0_23 = arith.constant 0 : index
    %46 = vector.load %arg10[%c0_22, %c0_23] : memref<2x32xbf16, #tpu.memory_space<vmem>>, vector<2x32xbf16>
    %47 = arith.mulf %45, %10 : vector<32x32xbf16>
    %cst_24 = arith.constant dense<0.000000e+00> : vector<2x32xf32>
    %48 = tpu.matmul %46, %47, %cst_24 {dimension_numbers = #tpu.dot_dimension_numbers<[1], [0], [0], [1], [0, 0, 1, 1], [], []>} : vector<2x32xbf16>, vector<32x32xbf16>, vector<2x32xf32> -> vector<2x32xf32>
    %c0_25 = arith.constant 0 : index
    %c0_26 = arith.constant 0 : index
    %49 = vector.load %arg8[%c0_25, %c0_26] : memref<4x32xbf16, #tpu.memory_space<vmem>>, vector<4x32xbf16>
    %50 = arith.extf %49 : vector<4x32xbf16> to vector<4x32xf32>
    %cst_27 = arith.constant dense<0.000000e+00> : vector<2x32xf32>
    %51 = tpu.matmul %37, %50, %cst_27 {dimension_numbers = #tpu.dot_dimension_numbers<[1], [0], [0], [1], [0, 0, 1, 1], [], []>} : vector<2x4xf32>, vector<4x32xf32>, vector<2x32xf32> -> vector<2x32xf32>
    %52 = arith.mulf %51, %16 : vector<2x32xf32>
    %53 = arith.addf %48, %52 : vector<2x32xf32>
    %cst_28 = arith.constant dense<0.000000e+00> : vector<2x32xf32>
    %54 = tpu.matmul %40, %50, %cst_28 {dimension_numbers = #tpu.dot_dimension_numbers<[1], [0], [0], [1], [0, 0, 1, 1], [], []>} : vector<2x4xf32>, vector<4x32xf32>, vector<2x32xf32> -> vector<2x32xf32>
    %55 = arith.mulf %53, %54 : vector<2x32xf32>
    %56 = arith.truncf %55 : vector<2x32xf32> to vector<2x32xbf16>
    %c0_29 = arith.constant 0 : index
    %c0_30 = arith.constant 0 : index
    %57 = vector.load %arg5[%c0_29, %c0_30] : memref<32x128xbf16, #tpu.memory_space<vmem>>, vector<32x128xbf16>
    %cst_31 = arith.constant dense<0.000000e+00> : vector<2x128xf32>
    %58 = tpu.matmul %56, %57, %cst_31 {dimension_numbers = #tpu.dot_dimension_numbers<[1], [0], [0], [1], [0, 0, 1, 1], [], []>} : vector<2x32xbf16>, vector<32x128xbf16>, vector<2x128xf32> -> vector<2x128xf32>
    %c0_32 = arith.constant 0 : index
    %c0_33 = arith.constant 0 : index
    %59 = vector.load %arg6[%c0_32, %c0_33] : memref<1x128xf32, #tpu.memory_space<vmem>>, vector<1x128xf32>
    %60 = vector.broadcast %59 : vector<1x128xf32> to vector<2x128xf32>
    %61 = arith.addf %58, %60 : vector<2x128xf32>
    %c0_34 = arith.constant 0 : index
    %c0_35 = arith.constant 0 : index
    %62 = vector.load %arg11[%c0_34, %c0_35] : memref<2x128xf32, #tpu.memory_space<vmem>>, vector<2x128xf32>
    tpu.vector_store %arg11[%c0_34, %c0_35], %61 {strides = array<i32>} : memref<2x128xf32, #tpu.memory_space<vmem>>, vector<2x128xf32>,
    return
  }
  func.func @transform_0(%arg0: i32) -> (i32, i32) {
    %c0_i32 = arith.constant 0 : i32
    %c0_i32_0 = arith.constant 0 : i32
    return %arg0, %c0_i32 : i32, i32
  }
  func.func @transform_1(%arg0: i32) -> (i32, i32) {
    %c0_i32 = arith.constant 0 : i32
    %c0_i32_0 = arith.constant 0 : i32
    return %arg0, %c0_i32 : i32, i32
  }
  func.func @transform_2(%arg0: i32) -> (i32, i32) {
    %c0_i32 = arith.constant 0 : i32
    %c0_i32_0 = arith.constant 0 : i32
    %c0_i32_1 = arith.constant 0 : i32
    return %c0_i32, %c0_i32_0 : i32, i32
  }
  func.func @transform_3(%arg0: i32) -> (i32, i32) {
    %c0_i32 = arith.constant 0 : i32
    %c0_i32_0 = arith.constant 0 : i32
    %c0_i32_1 = arith.constant 0 : i32
    return %c0_i32, %c0_i32_0 : i32, i32
  }
  func.func @transform_4(%arg0: i32) -> (i32, i32) {
    %c0_i32 = arith.constant 0 : i32
    %c0_i32_0 = arith.constant 0 : i32
    %c0_i32_1 = arith.constant 0 : i32
    return %c0_i32, %c0_i32_0 : i32, i32
  }
  func.func @transform_5(%arg0: i32) -> (i32, i32) {
    %c0_i32 = arith.constant 0 : i32
    %c0_i32_0 = arith.constant 0 : i32
    %c0_i32_1 = arith.constant 0 : i32
    return %c0_i32, %c0_i32_0 : i32, i32
  }
  func.func @transform_6(%arg0: i32) -> (i32, i32) {
    %c0_i32 = arith.constant 0 : i32
    %c0_i32_0 = arith.constant 0 : i32
    %c0_i32_1 = arith.constant 0 : i32
    return %c0_i32, %c0_i32_0 : i32, i32
  }
  func.func @transform_7(%arg0: i32) -> (i32, i32) {
    %c0_i32 = arith.constant 0 : i32
    %c0_i32_0 = arith.constant 0 : i32
    %c0_i32_1 = arith.constant 0 : i32
    return %c0_i32, %c0_i32_0 : i32, i32
  }
  func.func @transform_8(%arg0: i32) -> (i32, i32) {
    %c0_i32 = arith.constant 0 : i32
    %c0_i32_0 = arith.constant 0 : i32
    %c0_i32_1 = arith.constant 0 : i32
    return %c0_i32, %c0_i32_0 : i32, i32
  }
  func.func @transform_9(%arg0: i32) -> (i32, i32) {
    %c0_i32 = arith.constant 0 : i32
    %c0_i32_0 = arith.constant 0 : i32
    %c0_i32_1 = arith.constant 0 : i32
    return %c0_i32, %c0_i32_0 : i32, i32
  }
  func.func @transform_10(%arg0: i32) -> (i32, i32) {
    %c0_i32 = arith.constant 0 : i32
    %c0_i32_0 = arith.constant 0 : i32
    return %arg0, %c0_i32 : i32, i32
  }
}

module attributes {stable_mosaic.version = 11 : i64} {
  func.func @_attention_pool_kernel(%arg0: i32, %arg1: memref<32x32xbf16, #tpu.memory_space<vmem>>, %arg2: memref<2x32xbf16, #tpu.memory_space<vmem>>, %arg3: memref<32x96xbf16, #tpu.memory_space<vmem>>, %arg4: memref<1x96xf32, #tpu.memory_space<vmem>>, %arg5: memref<32x128xbf16, #tpu.memory_space<vmem>>, %arg6: memref<1x128xf32, #tpu.memory_space<vmem>>, %arg7: memref<32x4xbf16, #tpu.memory_space<vmem>>, %arg8: memref<4x32xbf16, #tpu.memory_space<vmem>>, %arg9: memref<32x2xbf16, #tpu.memory_space<vmem>>, %arg10: memref<2x32xbf16, #tpu.memory_space<vmem>>, %arg11: memref<2x128xf32, #tpu.memory_space<vmem>>) attributes {dimension_semantics = [#tpu.dimension_semantics<parallel>], iteration_bounds = array<i64: 1>, scalar_prefetch = 0 : i64, scratch_operands = 0 : i64, tpu.core_type = #tpu.core_type<tc>, window_params = [{transform_indices = @transform_0, window_bounds = array<i64: 32, 32>}, {transform_indices = @transform_1, window_bounds = array<i64: 2, 32>}, {pipeline_mode = #tpu.pipeline_mode<synchronous>, transform_indices = @transform_2, window_bounds = array<i64: 32, 96>}, {pipeline_mode = #tpu.pipeline_mode<synchronous>, transform_indices = @transform_3, window_bounds = array<i64: 1, 96>}, {pipeline_mode = #tpu.pipeline_mode<synchronous>, transform_indices = @transform_4, window_bounds = array<i64: 32, 128>}, {pipeline_mode = #tpu.pipeline_mode<synchronous>, transform_indices = @transform_5, window_bounds = array<i64: 1, 128>}, {pipeline_mode = #tpu.pipeline_mode<synchronous>, transform_indices = @transform_6, window_bounds = array<i64: 32, 4>}, {pipeline_mode = #tpu.pipeline_mode<synchronous>, transform_indices = @transform_7, window_bounds = array<i64: 4, 32>}, {pipeline_mode = #tpu.pipeline_mode<synchronous>, transform_indices = @transform_8, window_bounds = array<i64: 32, 2>}, {pipeline_mode = #tpu.pipeline_mode<synchronous>, transform_indices = @transform_9, window_bounds = array<i64: 2, 32>}, {transform_indices = @transform_10, window_bounds = array<i64: 2, 128>}]} {
    %c0 = arith.constant 0 : index
    %c0_0 = arith.constant 0 : index
    %0 = vector.load %arg3[%c0, %c0_0] : memref<32x96xbf16, #tpu.memory_space<vmem>>, vector<32x96xbf16>
    %c0_1 = arith.constant 0 : index
    %c0_2 = arith.constant 0 : index
    %1 = vector.load %arg4[%c0_1, %c0_2] : memref<1x96xf32, #tpu.memory_space<vmem>>, vector<1x96xf32>
    %c0_3 = arith.constant 0 : index
    %c0_4 = arith.constant 0 : index
    %2 = vector.load %arg1[%c0_3, %c0_4] : memref<32x32xbf16, #tpu.memory_space<vmem>>, vector<32x32xbf16>
    %3 = vector.extract_strided_slice %0 {offsets = [0, 0], sizes = [32, 64], strides = [1, 1]} : vector<32x96xbf16> to vector<32x64xbf16>
    %cst = arith.constant dense<0.000000e+00> : vector<32x64xf32>
    %4 = tpu.matmul %2, %3, %cst {dimension_numbers = #tpu.dot_dimension_numbers<[1], [0], [0], [1], [0, 0, 1, 1], [], []>} : vector<32x32xbf16>, vector<32x64xbf16>, vector<32x64xf32> -> vector<32x64xf32>
    %5 = vector.extract_strided_slice %1 {offsets = [0, 0], sizes = [1, 64], strides = [1, 1]} : vector<1x96xf32> to vector<1x64xf32>
    %6 = vector.broadcast %5 : vector<1x64xf32> to vector<32x64xf32>
    %7 = arith.addf %4, %6 : vector<32x64xf32>
    %8 = arith.truncf %7 : vector<32x64xf32> to vector<32x64xbf16>
    %9 = vector.extract_strided_slice %8 {offsets = [0, 0], sizes = [32, 32], strides = [1, 1]} : vector<32x64xbf16> to vector<32x32xbf16>
    %10 = vector.extract_strided_slice %8 {offsets = [0, 32], sizes = [32, 32], strides = [1, 1]} : vector<32x64xbf16> to vector<32x32xbf16>
    %c0_5 = arith.constant 0 : index
    %c0_6 = arith.constant 0 : index
    %11 = vector.load %arg2[%c0_5, %c0_6] : memref<2x32xbf16, #tpu.memory_space<vmem>>, vector<2x32xbf16>
    %cst_7 = arith.constant dense<0.000000e+00> : vector<2x96xf32>
    %12 = tpu.matmul %11, %0, %cst_7 {dimension_numbers = #tpu.dot_dimension_numbers<[1], [0], [0], [1], [0, 0, 1, 1], [], []>} : vector<2x32xbf16>, vector<32x96xbf16>, vector<2x96xf32> -> vector<2x96xf32>
    %13 = vector.broadcast %1 : vector<1x96xf32> to vector<2x96xf32>
    %14 = arith.addf %12, %13 : vector<2x96xf32>
    %15 = vector.extract_strided_slice %14 {offsets = [0, 0], sizes = [2, 32], strides = [1, 1]} : vector<2x96xf32> to vector<2x32xf32>
    %16 = vector.extract_strided_slice %14 {offsets = [0, 32], sizes = [2, 32], strides = [1, 1]} : vector<2x96xf32> to vector<2x32xf32>
    %17 = vector.extract_strided_slice %14 {offsets = [0, 64], sizes = [2, 32], strides = [1, 1]} : vector<2x96xf32> to vector<2x32xf32>
    %c0_8 = arith.constant 0 : index
    %c0_9 = arith.constant 0 : index
    %18 = vector.load %arg9[%c0_8, %c0_9] : memref<32x2xbf16, #tpu.memory_space<vmem>>, vector<32x2xbf16>
    %19 = arith.truncf %17 : vector<2x32xf32> to vector<2x32xbf16>
    %cst_10 = arith.constant dense<0.000000e+00> : vector<32x32xf32>
    %20 = tpu.matmul %18, %19, %cst_10 {dimension_numbers = #tpu.dot_dimension_numbers<[1], [0], [0], [1], [0, 0, 1, 1], [], []>} : vector<32x2xbf16>, vector<2x32xbf16>, vector<32x32xf32> -> vector<32x32xf32>
    %21 = arith.truncf %20 : vector<32x32xf32> to vector<32x32xbf16>
    %22 = arith.mulf %21, %9 : vector<32x32xbf16>
    %c0_11 = arith.constant 0 : index
    %c0_12 = arith.constant 0 : index
    %23 = vector.load %arg7[%c0_11, %c0_12] : memref<32x4xbf16, #tpu.memory_space<vmem>>, vector<32x4xbf16>
    %cst_13 = arith.constant dense<0.000000e+00> : vector<32x4xf32>
    %24 = tpu.matmul %22, %23, %cst_13 {dimension_numbers = #tpu.dot_dimension_numbers<[1], [0], [0], [1], [0, 0, 1, 1], [], []>} : vector<32x32xbf16>, vector<32x4xbf16>, vector<32x4xf32> -> vector<32x4xf32>
    %25 = arith.mulf %17, %15 : vector<2x32xf32>
    %26 = arith.truncf %25 : vector<2x32xf32> to vector<2x32xbf16>
    %c0_14 = arith.constant 0 : index
    %c0_15 = arith.constant 0 : index
    %27 = vector.load %arg7[%c0_14, %c0_15] : memref<32x4xbf16, #tpu.memory_space<vmem>>, vector<32x4xbf16>
    %cst_16 = arith.constant dense<0.000000e+00> : vector<2x4xf32>
    %28 = tpu.matmul %26, %27, %cst_16 {dimension_numbers = #tpu.dot_dimension_numbers<[1], [0], [0], [1], [0, 0, 1, 1], [], []>} : vector<2x32xbf16>, vector<32x4xbf16>, vector<2x4xf32> -> vector<2x4xf32>
    %29 = vector.shape_cast %24 : vector<32x4xf32> to vector<2x16x4xf32>
    %cst_17 = arith.constant dense<0xFF800000> : vector<2x4xf32>
    %30 = vector.multi_reduction <maximumf>, %29, %cst_17 [1] : vector<2x16x4xf32> to vector<2x4xf32>
    %31 = arith.maximumf %30, %28 : vector<2x4xf32>
    %32 = vector.shape_cast %31 : vector<2x4xf32> to vector<2x1x4xf32>
    %33 = vector.broadcast %32 : vector<2x1x4xf32> to vector<2x16x4xf32>
    %34 = arith.subf %29, %33 : vector<2x16x4xf32>
    %35 = math.exp %34 : vector<2x16x4xf32>
    %36 = arith.subf %28, %31 : vector<2x4xf32>
    %37 = math.exp %36 : vector<2x4xf32>
    %cst_18 = arith.constant dense<0.000000e+00> : vector<2x4xf32>
    %38 = vector.multi_reduction <add>, %35, %cst_18 [1] : vector<2x16x4xf32> to vector<2x4xf32>
    %39 = arith.addf %38, %37 : vector<2x4xf32>
    %40 = tpu.reciprocal %39 : vector<2x4xf32> -> vector<2x4xf32>
    %41 = vector.shape_cast %35 : vector<2x16x4xf32> to vector<32x4xf32>
    %42 = arith.truncf %41 : vector<32x4xf32> to vector<32x4xbf16>
    %c0_19 = arith.constant 0 : index
    %c0_20 = arith.constant 0 : index
    %43 = vector.load %arg8[%c0_19, %c0_20] : memref<4x32xbf16, #tpu.memory_space<vmem>>, vector<4x32xbf16>
    %cst_21 = arith.constant dense<0.000000e+00> : vector<32x32xf32>
    %44 = tpu.matmul %42, %43, %cst_21 {dimension_numbers = #tpu.dot_dimension_numbers<[1], [0], [0], [1], [0, 0, 1, 1], [], []>} : vector<32x4xbf16>, vector<4x32xbf16>, vector<32x32xf32> -> vector<32x32xf32>
    %45 = arith.truncf %44 : vector<32x32xf32> to vector<32x32xbf16>
    %c0_22 = arith.constant 0 : index
    %c0_23 = arith.constant 0 : index
    %46 = vector.load %arg10[%c0_22, %c0_23] : memref<2x32xbf16, #tpu.memory_space<vmem>>, vector<2x32xbf16>
    %47 = arith.mulf %45, %10 : vector<32x32xbf16>
    %cst_24 = arith.constant dense<0.000000e+00> : vector<2x32xf32>
    %48 = tpu.matmul %46, %47, %cst_24 {dimension_numbers = #tpu.dot_dimension_numbers<[1], [0], [0], [1], [0, 0, 1, 1], [], []>} : vector<2x32xbf16>, vector<32x32xbf16>, vector<2x32xf32> -> vector<2x32xf32>
    %c0_25 = arith.constant 0 : index
    %c0_26 = arith.constant 0 : index
    %49 = vector.load %arg8[%c0_25, %c0_26] : memref<4x32xbf16, #tpu.memory_space<vmem>>, vector<4x32xbf16>
    %50 = arith.extf %49 : vector<4x32xbf16> to vector<4x32xf32>
    %cst_27 = arith.constant dense<0.000000e+00> : vector<2x32xf32>
    %51 = tpu.matmul %37, %50, %cst_27 {dimension_numbers = #tpu.dot_dimension_numbers<[1], [0], [0], [1], [0, 0, 1, 1], [], []>} : vector<2x4xf32>, vector<4x32xf32>, vector<2x32xf32> -> vector<2x32xf32>
    %52 = arith.mulf %51, %16 : vector<2x32xf32>
    %53 = arith.addf %48, %52 : vector<2x32xf32>
    %cst_28 = arith.constant dense<0.000000e+00> : vector<2x32xf32>
    %54 = tpu.matmul %40, %50, %cst_28 {dimension_numbers = #tpu.dot_dimension_numbers<[1], [0], [0], [1], [0, 0, 1, 1], [], []>} : vector<2x4xf32>, vector<4x32xf32>, vector<2x32xf32> -> vector<2x32xf32>
    %55 = arith.mulf %53, %54 : vector<2x32xf32>
    %56 = arith.truncf %55 : vector<2x32xf32> to vector<2x32xbf16>
    %c0_29 = arith.constant 0 : index
    %c0_30 = arith.constant 0 : index
    %57 = vector.load %arg5[%c0_29, %c0_30] : memref<32x128xbf16, #tpu.memory_space<vmem>>, vector<32x128xbf16>
    %cst_31 = arith.constant dense<0.000000e+00> : vector<2x128xf32>
    %58 = tpu.matmul %56, %57, %cst_31 {dimension_numbers = #tpu.dot_dimension_numbers<[1], [0], [0], [1], [0, 0, 1, 1], [], []>} : vector<2x32xbf16>, vector<32x128xbf16>, vector<2x128xf32> -> vector<2x128xf32>
    %c0_32 = arith.constant 0 : index
    %c0_33 = arith.constant 0 : index
    %59 = vector.load %arg6[%c0_32, %c0_33] : memref<1x128xf32, #tpu.memory_space<vmem>>, vector<1x128xf32>
    %60 = vector.broadcast %59 : vector<1x128xf32> to vector<2x128xf32>
    %61 = arith.addf %58, %60 : vector<2x128xf32>
    %c0_34 = arith.constant 0 : index
    %c0_35 = arith.constant 0 : index
    %62 = vector.load %arg11[%c0_34, %c0_35] : memref<2x128xf32, #tpu.memory_space<vmem>>, vector<2x128xf32>
    tpu.vector_store %arg11[%c0_34, %c0_35], %61 {strides = array<i32>} : memref<2x128xf32, #tpu.memory_space<vmem>>, vector<2x128xf32>,
    return
  }
  func.func @transform_0(%arg0: i32) -> (i32, i32) {
    %c0_i32 = arith.constant 0 : i32
    %c0_i32_0 = arith.constant 0 : i32
    return %arg0, %c0_i32 : i32, i32
  }
  func.func @transform_1(%arg0: i32) -> (i32, i32) {
    %c0_i32 = arith.constant 0 : i32
    %c0_i32_0 = arith.constant 0 : i32
    return %arg0, %c0_i32 : i32, i32
  }
  func.func @transform_2(%arg0: i32) -> (i32, i32) {
    %c0_i32 = arith.constant 0 : i32
    %c0_i32_0 = arith.constant 0 : i32
    %c0_i32_1 = arith.constant 0 : i32
    return %c0_i32, %c0_i32_0 : i32, i32
  }
  func.func @transform_3(%arg0: i32) -> (i32, i32) {
    %c0_i32 = arith.constant 0 : i32
    %c0_i32_0 = arith.constant 0 : i32
    %c0_i32_1 = arith.constant 0 : i32
    return %c0_i32, %c0_i32_0 : i32, i32
  }
  func.func @transform_4(%arg0: i32) -> (i32, i32) {
    %c0_i32 = arith.constant 0 : i32
    %c0_i32_0 = arith.constant 0 : i32
    %c0_i32_1 = arith.constant 0 : i32
    return %c0_i32, %c0_i32_0 : i32, i32
  }
  func.func @transform_5(%arg0: i32) -> (i32, i32) {
    %c0_i32 = arith.constant 0 : i32
    %c0_i32_0 = arith.constant 0 : i32
    %c0_i32_1 = arith.constant 0 : i32
    return %c0_i32, %c0_i32_0 : i32, i32
  }
  func.func @transform_6(%arg0: i32) -> (i32, i32) {
    %c0_i32 = arith.constant 0 : i32
    %c0_i32_0 = arith.constant 0 : i32
    %c0_i32_1 = arith.constant 0 : i32
    return %c0_i32, %c0_i32_0 : i32, i32
  }
  func.func @transform_7(%arg0: i32) -> (i32, i32) {
    %c0_i32 = arith.constant 0 : i32
    %c0_i32_0 = arith.constant 0 : i32
    %c0_i32_1 = arith.constant 0 : i32
    return %c0_i32, %c0_i32_0 : i32, i32
  }
  func.func @transform_8(%arg0: i32) -> (i32, i32) {
    %c0_i32 = arith.constant 0 : i32
    %c0_i32_0 = arith.constant 0 : i32
    %c0_i32_1 = arith.constant 0 : i32
    return %c0_i32, %c0_i32_0 : i32, i32
  }
  func.func @transform_9(%arg0: i32) -> (i32, i32) {
    %c0_i32 = arith.constant 0 : i32
    %c0_i32_0 = arith.constant 0 : i32
    %c0_i32_1 = arith.constant 0 : i32
    return %c0_i32, %c0_i32_0 : i32, i32
  }
  func.func @transform_10(%arg0: i32) -> (i32, i32) {
    %c0_i32 = arith.constant 0 : i32
    %c0_i32_0 = arith.constant 0 : i32
    return %arg0, %c0_i32 : i32, i32
  }
}

</mosaic_0001>

<llo_original>
// kernel: tpu_custom_call.1
$region0: #{tpu_custom_call.1}
  #allocation0 [shape = 'u32[]', space=smem, size = 0x4, offset = 0x4, fixed_abs, tag = 'smem constant byte address 0x4 - core index']
  #allocation1 [shape = 'u32[144,128]{1,0:T(1,128)}', space=vmem, size = 0x12000, scoped, tag = 'internal scratch']
  %s0 = inlined_call_operand.vmem [shape: bf16[32,32], index: 0, kind: input, shape index: {}]
  %s1 = inlined_call_operand.hbm [shape: bf16[2,32], index: 1, kind: input, shape index: {}]
  %s2 = inlined_call_operand.vmem [shape: bf16[32,96], index: 2, kind: input, shape index: {}]
  %s3 = inlined_call_operand.hbm [shape: f32[1,96], index: 3, kind: input, shape index: {}]
  %s4 = inlined_call_operand.vmem [shape: bf16[32,128], index: 4, kind: input, shape index: {}]
  %s5 = inlined_call_operand.vmem [shape: f32[1,128], index: 5, kind: input, shape index: {}]
  %s6 = inlined_call_operand.vmem [shape: bf16[32,4], index: 6, kind: input, shape index: {}]
  %s7 = inlined_call_operand.vmem [shape: bf16[4,32], index: 7, kind: input, shape index: {}]
  %s8 = inlined_call_operand.vmem [shape: bf16[32,2], index: 8, kind: input, shape index: {}]
  %s9 = inlined_call_operand.vmem [shape: bf16[2,32], index: 9, kind: input, shape index: {}]
  %s10 = inlined_call_operand.hbm [shape: f32[2,128], index: 10, kind: output, shape index: {}]
  %s11 = sld [smem:[#allocation0]]
  $region58: #{tpu_custom_call.1} parent=0
    _
  %s13 = ssub.s32 1, %s11
  %s14 = scalar_select 0, %s13, %s11
  $region1: #{tpu_custom_call.1} parent=0
    #allocation2 [shape = 'u8[512]{0}', space=vmem, size = 0x400, scoped, tag = 'input window, operand 1, single buffered']
    #allocation3 [shape = 's32[1]{0}', space=sflag, size = 0x4, scoped, tag = 'scoped memory for tpu_custom_call.1']
    #allocation4 [shape = 's32[1]{0}', space=sflag, size = 0x4, scoped, tag = 'scoped memory for tpu_custom_call.1']
    #allocation5 [shape = 'u8[512]{0}', space=vmem, size = 0x400, scoped, tag = 'input window, operand 3, single buffered']
    #allocation6 [shape = 's32[1]{0}', space=sflag, size = 0x4, scoped, tag = 'scoped memory for tpu_custom_call.1']
    #allocation7 [shape = 'u8[1024]{0}', space=vmem, size = 0x400, scoped, tag = 'output window, operand 0, single buffered']
    %15 = vsyncpa [#allocation3], 0
    %16 = vsyncpa [#allocation6], 0
    %17 = vsyncpa [#allocation4], 0
    // Predicated region
    $region2: #{tpu_custom_call.1} parent=1 // pred_check
      _
    $region3: #{tpu_custom_call.1} parent=1 // pred_check_branch
      %19 = sbr.rel (0) target = $region5
    $region4: #{tpu_custom_call.1} parent=1 // pred_region
      _
    $region5: #{tpu_custom_call.1} parent=1 // pred_fallthru
      _
    // Predicated region
    $region6: #{tpu_custom_call.1} parent=1 // pred_check
      _
    $region7: #{tpu_custom_call.1} parent=1 // pred_check_branch
      %21 = sbr.rel (0) target = $region9
    $region8: #{tpu_custom_call.1} parent=1 // pred_region
      %s23 = ssub.s32 16, 16
      %24 = vsyncadd [#allocation3], %s23
      %s26 = sshll.u32 [#allocation2], 4
      %s27 = int_to_ptr.vmem [resolvable:$true] %s26
      %29 = dma.hbm_to_vmem [thread:$0]  %s1, 16, %s27, [#allocation3]
    $region9: #{tpu_custom_call.1} parent=1 // pred_fallthru
      _
    // Predicated region
    $region10: #{tpu_custom_call.1} parent=1 // pred_check
      _
    $region11: #{tpu_custom_call.1} parent=1 // pred_check_branch
      %31 = sbr.rel (0) target = $region13
    $region12: #{tpu_custom_call.1} parent=1 // pred_region
      _
    $region13: #{tpu_custom_call.1} parent=1 // pred_fallthru
      _
    // Predicated region
    $region14: #{tpu_custom_call.1} parent=1 // pred_check
      _
    $region15: #{tpu_custom_call.1} parent=1 // pred_check_branch
      %33 = sbr.rel (0) target = $region17
    $region16: #{tpu_custom_call.1} parent=1 // pred_region
      %s35 = ssub.s32 16, 16
      %36 = vsyncadd [#allocation6], %s35
      %s38 = sshll.u32 [#allocation5], 4
      %s39 = int_to_ptr.vmem [resolvable:$true] %s38
      %41 = dma.hbm_to_vmem [thread:$0]  %s3, 16, %s39, [#allocation6]
    $region17: #{tpu_custom_call.1} parent=1 // pred_fallthru
      _
    // Predicated region
    $region18: #{tpu_custom_call.1} parent=1 // pred_check
      _
    $region19: #{tpu_custom_call.1} parent=1 // pred_check_branch
      %43 = sbr.rel (0) target = $region21
    $region20: #{tpu_custom_call.1} parent=1 // pred_region
      _
    $region21: #{tpu_custom_call.1} parent=1 // pred_fallthru
      _
    // Predicated region
    $region22: #{tpu_custom_call.1} parent=1 // pred_check
      _
    $region23: #{tpu_custom_call.1} parent=1 // pred_check_branch
      %45 = sbr.rel (0) target = $region25
    $region24: #{tpu_custom_call.1} parent=1 // pred_region
      _
    $region25: #{tpu_custom_call.1} parent=1 // pred_fallthru
      _
    // Predicated region
    $region26: #{tpu_custom_call.1} parent=1 // pred_check
      _
    $region27: #{tpu_custom_call.1} parent=1 // pred_check_branch
      %47 = sbr.rel (0) target = $region29
    $region28: #{tpu_custom_call.1} parent=1 // pred_region
      _
    $region29: #{tpu_custom_call.1} parent=1 // pred_fallthru
      _
    // Predicated region
    $region30: #{tpu_custom_call.1} parent=1 // pred_check
      _
    $region31: #{tpu_custom_call.1} parent=1 // pred_check_branch
      %49 = sbr.rel (0) target = $region33
    $region32: #{tpu_custom_call.1} parent=1 // pred_region
      _
    $region33: #{tpu_custom_call.1} parent=1 // pred_fallthru
      _
    // Predicated region
    $region34: #{tpu_custom_call.1} parent=1 // pred_check
      _
    $region35: #{tpu_custom_call.1} parent=1 // pred_check_branch
      %51 = sbr.rel (0) target = $region37
    $region36: #{tpu_custom_call.1} parent=1 // pred_region
      _
    $region37: #{tpu_custom_call.1} parent=1 // pred_fallthru
      _
    // Predicated region
    $region38: #{tpu_custom_call.1} parent=1 // pred_check
      _
    $region39: #{tpu_custom_call.1} parent=1 // pred_check_branch
      %53 = sbr.rel (0) target = $region41
    $region40: #{tpu_custom_call.1} parent=1 // pred_region
      _
    $region41: #{tpu_custom_call.1} parent=1 // pred_fallthru
      _
    // Predicated region
    $region42: #{tpu_custom_call.1} parent=1 // pred_check
      _
    $region43: #{tpu_custom_call.1} parent=1 // pred_check_branch
      %55 = sbr.rel (0) target = $region45
    $region44: #{tpu_custom_call.1} parent=1 // pred_region
      %56 = dma.done [#allocation3], 16
    $region45: #{tpu_custom_call.1} parent=1 // pred_fallthru
      _
    // Predicated region
    $region46: #{tpu_custom_call.1} parent=1 // pred_check
      _
    $region47: #{tpu_custom_call.1} parent=1 // pred_check_branch
      %58 = sbr.rel (0) target = $region49
    $region48: #{tpu_custom_call.1} parent=1 // pred_region
      %59 = dma.done [#allocation6], 16
    $region49: #{tpu_custom_call.1} parent=1 // pred_fallthru
      _
    %v61 = vld [vmem:[%s2] sm:$0xf]
    %v62 = vld [vmem:[%s2 + $0x4] sm:$0xf]
    %v63 = vld [vmem:[%s2 + $0x8] sm:$0xf]
    %v64 = vld [vmem:[%s2 + $0xc] sm:$0xf]
    %v65 = vld [vmem:[#allocation5] sm:$0x1]
    %v66 = vld [vmem:[%s0] sm:$0xf]
    %v67 = vld [vmem:[%s0 + $0x4] sm:$0xf]
    %v68 = vld [vmem:[%s0 + $0x8] sm:$0xf]
    %v69 = vld [vmem:[%s0 + $0xc] sm:$0xf]
    %v71 = vlaneseq
    %v72 = vshrl.u32 %v71, 7
    %v73 = vsub.s32 0, %v72
    %v74 = vrot.slane %v65, %v73
    %v80 = vunpack.c.l.b16 %v66
    %v81 = vunpack.c.l.b16 %v67
    %v82 = vunpack.c.l.b16 %v68
    %v83 = vunpack.c.l.b16 %v69
    %v84 = vpack.c.b16 %v81, %v80
    %v85 = vpack.c.b16 %v83, %v82
    %v90 = vunpack.c.l.b16 %v61
    %v91 = vunpack.c.l.b16 %v62
    %v92 = vunpack.c.l.b16 %v63
    %v93 = vunpack.c.l.b16 %v64
    %v94 = vpack.c.b16 %v91, %v90
    %v95 = vpack.c.b16 %v93, %v92
    %vm98 = vcmask 261120
    %v100 = vsel %vm98, %v84, 0
    %v103 = vsel %vm98, %v85, 0
    %105 = vmatprep.subr.bf16.mxu0 0
    %106 = vmatpush1.bf16.msra.mxu0 %v94
    %107 = vmatprep.subr.bf16.mxu0 0
    %108 = vmatpush1.bf16.msra.mxu0 %v95
    %109 = vmatprep.subr.bf16.mxu0 0
    %110 = vmatpush1.bf16.msra.mxu0 0
    %111 = vmatprep.subr.bf16.mxu0 0
    %112 = vmatpush1.bf16.msra.mxu0 0
    %113 = vmatprep.subr.bf16.mxu0 0
    %114 = vmatpush1.bf16.msra.mxu0 0
    %115 = vmatprep.subr.bf16.mxu0 0
    %116 = vmatpush1.bf16.msra.mxu0 0
    %117 = vmatprep.subr.bf16.mxu0 0
    %118 = vmatpush1.bf16.msra.mxu0 0
    %119 = vmatprep.subr.bf16.mxu0 0
    %120 = vmatpush1.bf16.msra.mxu0 0
    %121 = vmatprep.subr.bf16.mxu0 0
    %122 = vmatpush1.bf16.msra.mxu0 0
    %123 = vmatprep.subr.bf16.mxu0 0
    %124 = vmatpush1.bf16.msra.mxu0 0
    %125 = vmatprep.subr.bf16.mxu0 0
    %126 = vmatpush1.bf16.msra.mxu0 0
    %127 = vmatprep.subr.bf16.mxu0 0
    %128 = vmatpush1.bf16.msra.mxu0 0
    %129 = vmatprep.subr.bf16.mxu0 0
    %130 = vmatpush1.bf16.msra.mxu0 0
    %131 = vmatprep.subr.bf16.mxu0 0
    %132 = vmatpush1.bf16.msra.mxu0 0
    %133 = vmatprep.subr.bf16.mxu0 0
    %134 = vmatpush1.bf16.msra.mxu0 0
    %135 = vmatprep.subr.bf16.mxu0 0
    %136 = vmatpush1.bf16.msra.mxu0 0
    %137 = vmatprep.mubr.bf16.mxu0 0
    %138 = vmatmul.mubr.bf16.gmra.mrb[0].mxu0 %v100
    %v139 = vpop.f32.mrb[0].mxu0
    %v140 = vadd.f32 %v74, %v139
    %v141 = vpop.f32.mrb[0].mxu0
    %v142 = vpop.f32.mrb[0].mxu0
    %v143 = vadd.f32 %v74, %v142
    %v144 = vpop.f32.mrb[0].mxu0
    %145 = vmatprep.mubr.bf16.mxu0 0
    %146 = vmatmul.mubr.bf16.gmra.mrb[0].mxu0 %v103
    %v147 = vpop.f32.mrb[0].mxu0
    %v148 = vadd.f32 %v74, %v147
    %v149 = vpop.f32.mrb[0].mxu0
    %v150 = vpop.f32.mrb[0].mxu0
    %v151 = vadd.f32 %v74, %v150
    %v152 = vpop.f32.mrb[0].mxu0
    %153 = vdwg.mxu0
    %v154 = vpack.c.bf16 %v143, %v140
    %v155 = vpack.c.bf16 %v151, %v148
    %v156 = vld [vmem:[#allocation2] sm:$0x1]
    %v158 = vsel %vm98, %v156, 0
    %160 = vmatprep.subr.bf16.mxu0 0
    %161 = vmatpush1.bf16.msra.mxu0 %v94
    %162 = vmatprep.subr.bf16.mxu0 0
    %163 = vmatpush1.bf16.msra.mxu0 %v95
    %164 = vmatprep.subr.bf16.mxu0 0
    %165 = vmatpush1.bf16.msra.mxu0 0
    %166 = vmatprep.subr.bf16.mxu0 0
    %167 = vmatpush1.bf16.msra.mxu0 0
    %168 = vmatprep.subr.bf16.mxu0 0
    %169 = vmatpush1.bf16.msra.mxu0 0
    %170 = vmatprep.subr.bf16.mxu0 0
    %171 = vmatpush1.bf16.msra.mxu0 0
    %172 = vmatprep.subr.bf16.mxu0 0
    %173 = vmatpush1.bf16.msra.mxu0 0
    %174 = vmatprep.subr.bf16.mxu0 0
    %175 = vmatpush1.bf16.msra.mxu0 0
    %176 = vmatprep.subr.bf16.mxu0 0
    %177 = vmatpush1.bf16.msra.mxu0 0
    %178 = vmatprep.subr.bf16.mxu0 0
    %179 = vmatpush1.bf16.msra.mxu0 0
    %180 = vmatprep.subr.bf16.mxu0 0
    %181 = vmatpush1.bf16.msra.mxu0 0
    %182 = vmatprep.subr.bf16.mxu0 0
    %183 = vmatpush1.bf16.msra.mxu0 0
    %184 = vmatprep.subr.bf16.mxu0 0
    %185 = vmatpush1.bf16.msra.mxu0 0
    %186 = vmatprep.subr.bf16.mxu0 0
    %187 = vmatpush1.bf16.msra.mxu0 0
    %188 = vmatprep.subr.bf16.mxu0 0
    %189 = vmatpush1.bf16.msra.mxu0 0
    %190 = vmatprep.subr.bf16.mxu0 0
    %191 = vmatpush1.bf16.msra.mxu0 0
    %192 = vmatprep.mubr.bf16.mxu0 0
    %193 = vmatmul.mubr.bf16.gmra.mrb[0].mxu0 %v158
    %v194 = vpop.f32.mrb[0].mxu0
    %v195 = vadd.f32 %v74, %v194
    %v196 = vpop.f32.mrb[0].mxu0
    %v197 = vpop.f32.mrb[0].mxu0
    %v198 = vpop.f32.mrb[0].mxu0
    %199 = vdwg.mxu0
    %v200 = vld [vmem:[%s8] sm:$0xf]
    %v201 = vld [vmem:[%s8 + $0x4] sm:$0xf]
    %v202 = vld [vmem:[%s8 + $0x8] sm:$0xf]
    %v203 = vld [vmem:[%s8 + $0xc] sm:$0xf]
    %v204 = vpack.c.bf16 %v195, %v195
    %v209 = vunpack.c.l.b16 %v200
    %v210 = vunpack.c.l.b16 %v201
    %v211 = vunpack.c.l.b16 %v202
    %v212 = vunpack.c.l.b16 %v203
    %v213 = vpack.c.b16 %v210, %v209
    %v214 = vpack.c.b16 %v212, %v211
    %216 = vrot.lane.b32.xlu0 %v204, 64
    %v217 = vpop.permute.xlu0 %216
    %vm218 = vcmask 15360
    %v220 = vsel %vm218, %v213, 0
    %v223 = vsel %vm218, %v214, 0
    %vm225 = vcmask 1040384
    %v227 = vsel %vm225, %v217, 0
    %229 = vmatprep.subr.bf16.mxu0 0
    %230 = vmatpush1.bf16.msra.mxu0 %v227
    %231 = vmatprep.subr.bf16.mxu0 0
    %232 = vmatpush1.bf16.msra.mxu0 0
    %233 = vmatprep.subr.bf16.mxu0 0
    %234 = vmatpush1.bf16.msra.mxu0 0
    %235 = vmatprep.subr.bf16.mxu0 0
    %236 = vmatpush1.bf16.msra.mxu0 0
    %237 = vmatprep.subr.bf16.mxu0 0
    %238 = vmatpush1.bf16.msra.mxu0 0
    %239 = vmatprep.subr.bf16.mxu0 0
    %240 = vmatpush1.bf16.msra.mxu0 0
    %241 = vmatprep.subr.bf16.mxu0 0
    %242 = vmatpush1.bf16.msra.mxu0 0
    %243 = vmatprep.subr.bf16.mxu0 0
    %244 = vmatpush1.bf16.msra.mxu0 0
    %245 = vmatprep.subr.bf16.mxu0 0
    %246 = vmatpush1.bf16.msra.mxu0 0
    %247 = vmatprep.subr.bf16.mxu0 0
    %248 = vmatpush1.bf16.msra.mxu0 0
    %249 = vmatprep.subr.bf16.mxu0 0
    %250 = vmatpush1.bf16.msra.mxu0 0
    %251 = vmatprep.subr.bf16.mxu0 0
    %252 = vmatpush1.bf16.msra.mxu0 0
    %253 = vmatprep.subr.bf16.mxu0 0
    %254 = vmatpush1.bf16.msra.mxu0 0
    %255 = vmatprep.subr.bf16.mxu0 0
    %256 = vmatpush1.bf16.msra.mxu0 0
    %257 = vmatprep.subr.bf16.mxu0 0
    %258 = vmatpush1.bf16.msra.mxu0 0
    %259 = vmatprep.subr.bf16.mxu0 0
    %260 = vmatpush1.bf16.msra.mxu0 0
    %261 = vmatprep.mubr.bf16.mxu0 0
    %262 = vmatmul.mubr.bf16.gmra.mrb[0].mxu0 %v220
    %v263 = vpop.f32.mrb[0].mxu0
    %v264 = vadd.f32 0.0, %v263
    %v265 = vpop.f32.mrb[0].mxu0
    %v266 = vpop.f32.mrb[0].mxu0
    %v267 = vadd.f32 0.0, %v266
    %v268 = vpop.f32.mrb[0].mxu0
    %269 = vmatprep.mubr.bf16.mxu0 0
    %270 = vmatmul.mubr.bf16.gmra.mrb[0].mxu0 %v223
    %v271 = vpop.f32.mrb[0].mxu0
    %v272 = vadd.f32 0.0, %v271
    %v273 = vpop.f32.mrb[0].mxu0
    %v274 = vpop.f32.mrb[0].mxu0
    %v275 = vadd.f32 0.0, %v274
    %v276 = vpop.f32.mrb[0].mxu0
    %277 = vdwg.mxu0
    %v278 = vpack.c.bf16 %v267, %v264
    %v279 = vpack.c.bf16 %v275, %v272
    %v280 = vmul.bf16 %v278, %v154
    %v281 = vmul.bf16 %v279, %v155
    %v282 = vld [vmem:[%s6] sm:$0xf]
    %v283 = vld [vmem:[%s6 + $0x4] sm:$0xf]
    %v284 = vld [vmem:[%s6 + $0x8] sm:$0xf]
    %v285 = vld [vmem:[%s6 + $0xc] sm:$0xf]
    %v290 = vunpack.c.l.b16 %v282
    %v291 = vunpack.c.l.b16 %v283
    %v292 = vunpack.c.l.b16 %v284
    %v293 = vunpack.c.l.b16 %v285
    %v294 = vpack.c.b16 %v291, %v290
    %v295 = vpack.c.b16 %v293, %v292
    %v299 = vsel %vm98, %v280, 0
    %v302 = vsel %vm98, %v281, 0
    %304 = vmatprep.subr.bf16.mxu0 0
    %305 = vmatpush1.bf16.msra.mxu0 %v294
    %306 = vmatprep.subr.bf16.mxu0 0
    %307 = vmatpush1.bf16.msra.mxu0 %v295
    %308 = vmatprep.subr.bf16.mxu0 0
    %309 = vmatpush1.bf16.msra.mxu0 0
    %310 = vmatprep.subr.bf16.mxu0 0
    %311 = vmatpush1.bf16.msra.mxu0 0
    %312 = vmatprep.subr.bf16.mxu0 0
    %313 = vmatpush1.bf16.msra.mxu0 0
    %314 = vmatprep.subr.bf16.mxu0 0
    %315 = vmatpush1.bf16.msra.mxu0 0
    %316 = vmatprep.subr.bf16.mxu0 0
    %317 = vmatpush1.bf16.msra.mxu0 0
    %318 = vmatprep.subr.bf16.mxu0 0
    %319 = vmatpush1.bf16.msra.mxu0 0
    %320 = vmatprep.subr.bf16.mxu0 0
    %321 = vmatpush1.bf16.msra.mxu0 0
    %322 = vmatprep.subr.bf16.mxu0 0
    %323 = vmatpush1.bf16.msra.mxu0 0
    %324 = vmatprep.subr.bf16.mxu0 0
    %325 = vmatpush1.bf16.msra.mxu0 0
    %326 = vmatprep.subr.bf16.mxu0 0
    %327 = vmatpush1.bf16.msra.mxu0 0
    %328 = vmatprep.subr.bf16.mxu0 0
    %329 = vmatpush1.bf16.msra.mxu0 0
    %330 = vmatprep.subr.bf16.mxu0 0
    %331 = vmatpush1.bf16.msra.mxu0 0
    %332 = vmatprep.subr.bf16.mxu0 0
    %333 = vmatpush1.bf16.msra.mxu0 0
    %334 = vmatprep.subr.bf16.mxu0 0
    %335 = vmatpush1.bf16.msra.mxu0 0
    %336 = vmatprep.mubr.bf16.mxu0 0
    %337 = vmatmul.mubr.bf16.gmra.mrb[0].mxu0 %v299
    %v338 = vpop.f32.mrb[0].mxu0
    %v339 = vadd.f32 0.0, %v338
    %v340 = vpop.f32.mrb[0].mxu0
    %v341 = vpop.f32.mrb[0].mxu0
    %v342 = vadd.f32 0.0, %v341
    %v343 = vpop.f32.mrb[0].mxu0
    %344 = vmatprep.mubr.bf16.mxu0 0
    %345 = vmatmul.mubr.bf16.gmra.mrb[0].mxu0 %v302
    %v346 = vpop.f32.mrb[0].mxu0
    %v347 = vadd.f32 0.0, %v346
    %v348 = vpop.f32.mrb[0].mxu0
    %v349 = vpop.f32.mrb[0].mxu0
    %v350 = vadd.f32 0.0, %v349
    %v351 = vpop.f32.mrb[0].mxu0
    %352 = vdwg.mxu0
    %354 = vrot.lane.b32.xlu0 %v195, 64
    %v355 = vpop.permute.xlu0 %354
    %v357 = vmul.f32 %v195, %v355
    %v358 = vpack.c.bf16 %v357, %v357
    %360 = vrot.lane.b32.xlu0 %v358, 64
    %v361 = vpop.permute.xlu0 %360
    %v363 = vsel %vm98, %v361, 0
    %365 = vmatprep.subr.bf16.mxu0 0
    %366 = vmatpush1.bf16.msra.mxu0 %v294
    %367 = vmatprep.subr.bf16.mxu0 0
    %368 = vmatpush1.bf16.msra.mxu0 %v295
    %369 = vmatprep.subr.bf16.mxu0 0
    %370 = vmatpush1.bf16.msra.mxu0 0
    %371 = vmatprep.subr.bf16.mxu0 0
    %372 = vmatpush1.bf16.msra.mxu0 0
    %373 = vmatprep.subr.bf16.mxu0 0
    %374 = vmatpush1.bf16.msra.mxu0 0
    %375 = vmatprep.subr.bf16.mxu0 0
    %376 = vmatpush1.bf16.msra.mxu0 0
    %377 = vmatprep.subr.bf16.mxu0 0
    %378 = vmatpush1.bf16.msra.mxu0 0
    %379 = vmatprep.subr.bf16.mxu0 0
    %380 = vmatpush1.bf16.msra.mxu0 0
    %381 = vmatprep.subr.bf16.mxu0 0
    %382 = vmatpush1.bf16.msra.mxu0 0
    %383 = vmatprep.subr.bf16.mxu0 0
    %384 = vmatpush1.bf16.msra.mxu0 0
    %385 = vmatprep.subr.bf16.mxu0 0
    %386 = vmatpush1.bf16.msra.mxu0 0
    %387 = vmatprep.subr.bf16.mxu0 0
    %388 = vmatpush1.bf16.msra.mxu0 0
    %389 = vmatprep.subr.bf16.mxu0 0
    %390 = vmatpush1.bf16.msra.mxu0 0
    %391 = vmatprep.subr.bf16.mxu0 0
    %392 = vmatpush1.bf16.msra.mxu0 0
    %393 = vmatprep.subr.bf16.mxu0 0
    %394 = vmatpush1.bf16.msra.mxu0 0
    %395 = vmatprep.subr.bf16.mxu0 0
    %396 = vmatpush1.bf16.msra.mxu0 0
    %397 = vmatprep.mubr.bf16.mxu0 0
    %398 = vmatmul.mubr.bf16.gmra.mrb[0].mxu0 %v363
    %v399 = vpop.f32.mrb[0].mxu0
    %v400 = vadd.f32 0.0, %v399
    %v401 = vpop.f32.mrb[0].mxu0
    %v402 = vpop.f32.mrb[0].mxu0
    %v403 = vpop.f32.mrb[0].mxu0
    %404 = vdwg.mxu0
    %vm405 = vcmask 31744
    %v406 = vsel %vm405, %v339, -inf
    %v407 = vsel %vm405, %v342, -inf
    %v408 = vmax.f32 %v406, %v407
    %v409 = vrot.slane %v408, 4
    %v410 = vmax.f32 %v408, %v409
    %v411 = vrot.slane %v410, 2
    %v412 = vmax.f32 %v410, %v411
    %v413 = vrot.slane %v412, 1
    %v414 = vmax.f32 %v412, %v413
    %v415 = vsel %vm405, %v347, -inf
    %v416 = vsel %vm405, %v350, -inf
    %v417 = vmax.f32 %v415, %v416
    %v418 = vrot.slane %v417, 4
    %v419 = vmax.f32 %v417, %v418
    %v420 = vrot.slane %v419, 2
    %v421 = vmax.f32 %v419, %v420
    %v422 = vrot.slane %v421, 1
    %v423 = vmax.f32 %v421, %v422
    %v425 = vrot.slane %v400, 1
    %v428 = vmax.f32 %v414, %v400
    %v429 = vmax.f32 %v423, %v425
    %v430 = vlaneseq
    %v431 = vshrl.u32 %v430, 7
    %v432 = vsub.s32 0, %v431
    %v433 = vrot.slane %v428, %v432
    %v434 = vlaneseq
    %v435 = vshrl.u32 %v434, 7
    %v436 = vsub.s32 0, %v435
    %v437 = vrot.slane %v429, %v436
    %v438 = vsub.f32 %v339, %v433
    %v439 = vsub.f32 %v342, %v433
    %v440 = vsub.f32 %v347, %v437
    %v441 = vsub.f32 %v350, %v437
    %v442 = vmul.f32 %v438, 1.442695
    %v443 = vpow.pop %v442
    %v444 = vmul.f32 %v439, 1.442695
    %v445 = vpow.pop %v444
    %v446 = vmul.f32 %v440, 1.442695
    %v447 = vpow.pop %v446
    %v448 = vmul.f32 %v441, 1.442695
    %v449 = vpow.pop %v448
    %v452 = vrot.slane %v429, 7
    %vm453 = vcmask 1041409
    %v454 = vsel %vm453, %v452, %v428
    %v456 = vsub.f32 %v400, %v454
    %v457 = vmul.f32 %v456, 1.442695
    %v458 = vpow.pop %v457
    %v459 = vsel %vm405, %v443, 0.0
    %v460 = vsel %vm405, %v445, 0.0
    %v461 = vadd.f32 %v459, %v460
    %v462 = vrot.slane %v461, 4
    %v463 = vadd.f32 %v461, %v462
    %v464 = vrot.slane %v463, 2
    %v465 = vadd.f32 %v463, %v464
    %v466 = vrot.slane %v465, 1
    %v467 = vadd.f32 %v465, %v466
    %v468 = vsel %vm405, %v447, 0.0
    %v469 = vsel %vm405, %v449, 0.0
    %v470 = vadd.f32 %v468, %v469
    %v471 = vrot.slane %v470, 4
    %v472 = vadd.f32 %v470, %v471
    %v473 = vrot.slane %v472, 2
    %v474 = vadd.f32 %v472, %v473
    %v475 = vrot.slane %v474, 1
    %v476 = vadd.f32 %v474, %v475
    %v478 = vrot.slane %v458, 1
    %v481 = vadd.f32 %v467, %v458
    %v482 = vadd.f32 %v476, %v478
    %v483 = vrcp.pop %v481
    %v484 = vrcp.pop %v482
    %v485 = vpack.c.bf16 %v445, %v443
    %v486 = vpack.c.bf16 %v449, %v447
    %v487 = vld [vmem:[%s7] sm:$0x3]
    %v489 = vsel %vm405, %v485, 0
    %v492 = vsel %vm405, %v486, 0
    %vm494 = vcmask 1041408
    %v496 = vsel %vm494, %v487, 0
    %498 = vmatprep.subr.bf16.mxu0 0
    %499 = vmatpush1.bf16.msra.mxu0 %v496
    %500 = vmatprep.subr.bf16.mxu0 0
    %501 = vmatpush1.bf16.msra.mxu0 0
    %502 = vmatprep.subr.bf16.mxu0 0
    %503 = vmatpush1.bf16.msra.mxu0 0
    %504 = vmatprep.subr.bf16.mxu0 0
    %505 = vmatpush1.bf16.msra.mxu0 0
    %506 = vmatprep.subr.bf16.mxu0 0
    %507 = vmatpush1.bf16.msra.mxu0 0
    %508 = vmatprep.subr.bf16.mxu0 0
    %509 = vmatpush1.bf16.msra.mxu0 0
    %510 = vmatprep.subr.bf16.mxu0 0
    %511 = vmatpush1.bf16.msra.mxu0 0
    %512 = vmatprep.subr.bf16.mxu0 0
    %513 = vmatpush1.bf16.msra.mxu0 0
    %514 = vmatprep.subr.bf16.mxu0 0
    %515 = vmatpush1.bf16.msra.mxu0 0
    %516 = vmatprep.subr.bf16.mxu0 0
    %517 = vmatpush1.bf16.msra.mxu0 0
    %518 = vmatprep.subr.bf16.mxu0 0
    %519 = vmatpush1.bf16.msra.mxu0 0
    %520 = vmatprep.subr.bf16.mxu0 0
    %521 = vmatpush1.bf16.msra.mxu0 0
    %522 = vmatprep.subr.bf16.mxu0 0
    %523 = vmatpush1.bf16.msra.mxu0 0
    %524 = vmatprep.subr.bf16.mxu0 0
    %525 = vmatpush1.bf16.msra.mxu0 0
    %526 = vmatprep.subr.bf16.mxu0 0
    %527 = vmatpush1.bf16.msra.mxu0 0
    %528 = vmatprep.subr.bf16.mxu0 0
    %529 = vmatpush1.bf16.msra.mxu0 0
    %530 = vmatprep.mubr.bf16.mxu0 0
    %531 = vmatmul.mubr.bf16.gmra.mrb[0].mxu0 %v489
    %v532 = vpop.f32.mrb[0].mxu0
    %v533 = vadd.f32 0.0, %v532
    %v534 = vpop.f32.mrb[0].mxu0
    %v535 = vpop.f32.mrb[0].mxu0
    %v536 = vadd.f32 0.0, %v535
    %v537 = vpop.f32.mrb[0].mxu0
    %538 = vmatprep.mubr.bf16.mxu0 0
    %539 = vmatmul.mubr.bf16.gmra.mrb[0].mxu0 %v492
    %v540 = vpop.f32.mrb[0].mxu0
    %v541 = vadd.f32 0.0, %v540
    %v542 = vpop.f32.mrb[0].mxu0
    %v543 = vpop.f32.mrb[0].mxu0
    %v544 = vadd.f32 0.0, %v543
    %v545 = vpop.f32.mrb[0].mxu0
    %546 = vdwg.mxu0
    %v547 = vpack.c.bf16 %v536, %v533
    %v548 = vpack.c.bf16 %v544, %v541
    %v549 = vld [vmem:[%s9] sm:$0x1]
    %552 = vrot.lane.b32.xlu0 %v154, 96
    %v553 = vpop.permute.xlu0 %552
    %554 = vrot.lane.b32.xlu0 %v155, 96
    %v555 = vpop.permute.xlu0 %554
    %v558 = vmul.bf16 %v547, %v553
    %v559 = vmul.bf16 %v548, %v555
    %v560 = vunpack.c.l.bf16 %v487
    %v561 = vsel %vm405, %v458, 0
    %vm563 = vcmask 1043456
    %v565 = vsel %vm563, %v560, 0
    %567 = vmatprep.subr.mxu0 0.0
    %568 = vmatpush1.msra.mxu0 %v565
    %569 = vmatprep.subr.mxu0 0.0
    %570 = vmatpush1.msra.mxu0 0.0
    %571 = vmatprep.subr.mxu0 0.0
    %572 = vmatpush1.msra.mxu0 0.0
    %573 = vmatprep.subr.mxu0 0.0
    %574 = vmatpush1.msra.mxu0 0.0
    %575 = vmatprep.subr.mxu0 0.0
    %576 = vmatpush1.msra.mxu0 0.0
    %577 = vmatprep.subr.mxu0 0.0
    %578 = vmatpush1.msra.mxu0 0.0
    %579 = vmatprep.subr.mxu0 0.0
    %580 = vmatpush1.msra.mxu0 0.0
    %581 = vmatprep.subr.mxu0 0.0
    %582 = vmatpush1.msra.mxu0 0.0
    %583 = vmatprep.subr.mxu0 0.0
    %584 = vmatpush1.msra.mxu0 0.0
    %585 = vmatprep.subr.mxu0 0.0
    %586 = vmatpush1.msra.mxu0 0.0
    %587 = vmatprep.subr.mxu0 0.0
    %588 = vmatpush1.msra.mxu0 0.0
    %589 = vmatprep.subr.mxu0 0.0
    %590 = vmatpush1.msra.mxu0 0.0
    %591 = vmatprep.subr.mxu0 0.0
    %592 = vmatpush1.msra.mxu0 0.0
    %593 = vmatprep.subr.mxu0 0.0
    %594 = vmatpush1.msra.mxu0 0.0
    %595 = vmatprep.subr.mxu0 0.0
    %596 = vmatpush1.msra.mxu0 0.0
    %597 = vmatprep.subr.mxu0 0.0
    %598 = vmatpush1.msra.mxu0 0.0
    %599 = vmatprep.subr.mxu0 0.0
    %600 = vmatpush1.msra.mxu0 0.0
    %601 = vmatprep.subr.mxu0 0.0
    %602 = vmatpush1.msra.mxu0 0.0
    %603 = vmatprep.subr.mxu0 0.0
    %604 = vmatpush1.msra.mxu0 0.0
    %605 = vmatprep.subr.mxu0 0.0
    %606 = vmatpush1.msra.mxu0 0.0
    %607 = vmatprep.subr.mxu0 0.0
    %608 = vmatpush1.msra.mxu0 0.0
    %609 = vmatprep.subr.mxu0 0.0
    %610 = vmatpush1.msra.mxu0 0.0
    %611 = vmatprep.subr.mxu0 0.0
    %612 = vmatpush1.msra.mxu0 0.0
    %613 = vmatprep.subr.mxu0 0.0
    %614 = vmatpush1.msra.mxu0 0.0
    %615 = vmatprep.subr.mxu0 0.0
    %616 = vmatpush1.msra.mxu0 0.0
    %617 = vmatprep.subr.mxu0 0.0
    %618 = vmatpush1.msra.mxu0 0.0
    %619 = vmatprep.subr.mxu0 0.0
    %620 = vmatpush1.msra.mxu0 0.0
    %621 = vmatprep.subr.mxu0 0.0
    %622 = vmatpush1.msra.mxu0 0.0
    %623 = vmatprep.subr.mxu0 0.0
    %624 = vmatpush1.msra.mxu0 0.0
    %625 = vmatprep.subr.mxu0 0.0
    %626 = vmatpush1.msra.mxu0 0.0
    %627 = vmatprep.subr.mxu0 0.0
    %628 = vmatpush1.msra.mxu0 0.0
    %629 = vmatprep.subr.mxu0 0.0
    %630 = vmatpush1.msra.mxu0 0.0
    %631 = vmatprep.mubr.f32.mxu0 0.0
    %632 = vmatmul.mubr.f32.gmra.mrb[0].mxu0 %v561
    %v633 = vpop.f32.mrb[0].mxu0
    %v634 = vadd.f32 0.0, %v633
    %v635 = vpop.f32.mrb[0].mxu0
    %636 = vdwg.mxu0
    %637 = vrot.lane.b32.xlu0 %v195, 96
    %v638 = vpop.permute.xlu0 %637
    %v640 = vmul.f32 %v634, %v638
    %v642 = vsel %vm98, %v549, 0
    %644 = vmatprep.subr.bf16.mxu0 0
    %645 = vmatpush1.bf16.msra.mxu0 %v558
    %646 = vmatprep.subr.bf16.mxu0 0
    %647 = vmatpush1.bf16.msra.mxu0 %v559
    %648 = vmatprep.subr.bf16.mxu0 0
    %649 = vmatpush1.bf16.msra.mxu0 0
    %650 = vmatprep.subr.bf16.mxu0 0
    %651 = vmatpush1.bf16.msra.mxu0 0
    %652 = vmatprep.subr.bf16.mxu0 0
    %653 = vmatpush1.bf16.msra.mxu0 0
    %654 = vmatprep.subr.bf16.mxu0 0
    %655 = vmatpush1.bf16.msra.mxu0 0
    %656 = vmatprep.subr.bf16.mxu0 0
    %657 = vmatpush1.bf16.msra.mxu0 0
    %658 = vmatprep.subr.bf16.mxu0 0
    %659 = vmatpush1.bf16.msra.mxu0 0
    %660 = vmatprep.subr.bf16.mxu0 0
    %661 = vmatpush1.bf16.msra.mxu0 0
    %662 = vmatprep.subr.bf16.mxu0 0
    %663 = vmatpush1.bf16.msra.mxu0 0
    %664 = vmatprep.subr.bf16.mxu0 0
    %665 = vmatpush1.bf16.msra.mxu0 0
    %666 = vmatprep.subr.bf16.mxu0 0
    %667 = vmatpush1.bf16.msra.mxu0 0
    %668 = vmatprep.subr.bf16.mxu0 0
    %669 = vmatpush1.bf16.msra.mxu0 0
    %670 = vmatprep.subr.bf16.mxu0 0
    %671 = vmatpush1.bf16.msra.mxu0 0
    %672 = vmatprep.subr.bf16.mxu0 0
    %673 = vmatpush1.bf16.msra.mxu0 0
    %674 = vmatprep.subr.bf16.mxu0 0
    %675 = vmatpush1.bf16.msra.mxu0 0
    %676 = vmatprep.mubr.bf16.mxu0 0
    %677 = vmatmul.mubr.bf16.gmra.mrb[0].mxu0 %v642
    %v678 = vpop.f32.mrb[0].mxu0
    %v679 = vadd.f32 %v640, %v678
    %v680 = vpop.f32.mrb[0].mxu0
    %v681 = vpop.f32.mrb[0].mxu0
    %v682 = vpop.f32.mrb[0].mxu0
    %683 = vdwg.mxu0
    %v686 = vrot.slane %v484, 7
    %v687 = vsel %vm453, %v686, %v483
    %v688 = vsel %vm405, %v687, 0
    %690 = vmatprep.subr.mxu0 0.0
    %691 = vmatpush1.msra.mxu0 %v565
    %692 = vmatprep.subr.mxu0 0.0
    %693 = vmatpush1.msra.mxu0 0.0
    %694 = vmatprep.subr.mxu0 0.0
    %695 = vmatpush1.msra.mxu0 0.0
    %696 = vmatprep.subr.mxu0 0.0
    %697 = vmatpush1.msra.mxu0 0.0
    %698 = vmatprep.subr.mxu0 0.0
    %699 = vmatpush1.msra.mxu0 0.0
    %700 = vmatprep.subr.mxu0 0.0
    %701 = vmatpush1.msra.mxu0 0.0
    %702 = vmatprep.subr.mxu0 0.0
    %703 = vmatpush1.msra.mxu0 0.0
    %704 = vmatprep.subr.mxu0 0.0
    %705 = vmatpush1.msra.mxu0 0.0
    %706 = vmatprep.subr.mxu0 0.0
    %707 = vmatpush1.msra.mxu0 0.0
    %708 = vmatprep.subr.mxu0 0.0
    %709 = vmatpush1.msra.mxu0 0.0
    %710 = vmatprep.subr.mxu0 0.0
    %711 = vmatpush1.msra.mxu0 0.0
    %712 = vmatprep.subr.mxu0 0.0
    %713 = vmatpush1.msra.mxu0 0.0
    %714 = vmatprep.subr.mxu0 0.0
    %715 = vmatpush1.msra.mxu0 0.0
    %716 = vmatprep.subr.mxu0 0.0
    %717 = vmatpush1.msra.mxu0 0.0
    %718 = vmatprep.subr.mxu0 0.0
    %719 = vmatpush1.msra.mxu0 0.0
    %720 = vmatprep.subr.mxu0 0.0
    %721 = vmatpush1.msra.mxu0 0.0
    %722 = vmatprep.subr.mxu0 0.0
    %723 = vmatpush1.msra.mxu0 0.0
    %724 = vmatprep.subr.mxu0 0.0
    %725 = vmatpush1.msra.mxu0 0.0
    %726 = vmatprep.subr.mxu0 0.0
    %727 = vmatpush1.msra.mxu0 0.0
    %728 = vmatprep.subr.mxu0 0.0
    %729 = vmatpush1.msra.mxu0 0.0
    %730 = vmatprep.subr.mxu0 0.0
    %731 = vmatpush1.msra.mxu0 0.0
    %732 = vmatprep.subr.mxu0 0.0
    %733 = vmatpush1.msra.mxu0 0.0
    %734 = vmatprep.subr.mxu0 0.0
    %735 = vmatpush1.msra.mxu0 0.0
    %736 = vmatprep.subr.mxu0 0.0
    %737 = vmatpush1.msra.mxu0 0.0
    %738 = vmatprep.subr.mxu0 0.0
    %739 = vmatpush1.msra.mxu0 0.0
    %740 = vmatprep.subr.mxu0 0.0
    %741 = vmatpush1.msra.mxu0 0.0
    %742 = vmatprep.subr.mxu0 0.0
    %743 = vmatpush1.msra.mxu0 0.0
    %744 = vmatprep.subr.mxu0 0.0
    %745 = vmatpush1.msra.mxu0 0.0
    %746 = vmatprep.subr.mxu0 0.0
    %747 = vmatpush1.msra.mxu0 0.0
    %748 = vmatprep.subr.mxu0 0.0
    %749 = vmatpush1.msra.mxu0 0.0
    %750 = vmatprep.subr.mxu0 0.0
    %751 = vmatpush1.msra.mxu0 0.0
    %752 = vmatprep.subr.mxu0 0.0
    %753 = vmatpush1.msra.mxu0 0.0
    %754 = vmatprep.mubr.f32.mxu0 0.0
    %755 = vmatmul.mubr.f32.gmra.mrb[0].mxu0 %v688
    %v756 = vpop.f32.mrb[0].mxu0
    %v757 = vadd.f32 0.0, %v756
    %v758 = vpop.f32.mrb[0].mxu0
    %759 = vdwg.mxu0
    %v760 = vmul.f32 %v679, %v757
    %v761 = vpack.c.bf16 %v760, %v760
    %v762 = vld [vmem:[%s4] sm:$0xf]
    %v763 = vld [vmem:[%s4 + $0x4] sm:$0xf]
    %v764 = vld [vmem:[%s4 + $0x8] sm:$0xf]
    %v765 = vld [vmem:[%s4 + $0xc] sm:$0xf]
    %v766 = vld [vmem:[%s5] sm:$0x1]
    %v768 = vlaneseq
    %v769 = vshrl.u32 %v768, 7
    %v770 = vsub.s32 0, %v769
    %v771 = vrot.slane %v766, %v770
    %v777 = vunpack.c.l.b16 %v762
    %v778 = vunpack.c.l.b16 %v763
    %v779 = vunpack.c.l.b16 %v764
    %v780 = vunpack.c.l.b16 %v765
    %v781 = vpack.c.b16 %v778, %v777
    %v782 = vpack.c.b16 %v780, %v779
    %v786 = vsel %vm98, %v761, 0
    %788 = vmatprep.subr.bf16.mxu0 0
    %789 = vmatpush1.bf16.msra.mxu0 %v781
    %790 = vmatprep.subr.bf16.mxu0 0
    %791 = vmatpush1.bf16.msra.mxu0 %v782
    %792 = vmatprep.subr.bf16.mxu0 0
    %793 = vmatpush1.bf16.msra.mxu0 0
    %794 = vmatprep.subr.bf16.mxu0 0
    %795 = vmatpush1.bf16.msra.mxu0 0
    %796 = vmatprep.subr.bf16.mxu0 0
    %797 = vmatpush1.bf16.msra.mxu0 0
    %798 = vmatprep.subr.bf16.mxu0 0
    %799 = vmatpush1.bf16.msra.mxu0 0
    %800 = vmatprep.subr.bf16.mxu0 0
    %801 = vmatpush1.bf16.msra.mxu0 0
    %802 = vmatprep.subr.bf16.mxu0 0
    %803 = vmatpush1.bf16.msra.mxu0 0
    %804 = vmatprep.subr.bf16.mxu0 0
    %805 = vmatpush1.bf16.msra.mxu0 0
    %806 = vmatprep.subr.bf16.mxu0 0
    %807 = vmatpush1.bf16.msra.mxu0 0
    %808 = vmatprep.subr.bf16.mxu0 0
    %809 = vmatpush1.bf16.msra.mxu0 0
    %810 = vmatprep.subr.bf16.mxu0 0
    %811 = vmatpush1.bf16.msra.mxu0 0
    %812 = vmatprep.subr.bf16.mxu0 0
    %813 = vmatpush1.bf16.msra.mxu0 0
    %814 = vmatprep.subr.bf16.mxu0 0
    %815 = vmatpush1.bf16.msra.mxu0 0
    %816 = vmatprep.subr.bf16.mxu0 0
    %817 = vmatpush1.bf16.msra.mxu0 0
    %818 = vmatprep.subr.bf16.mxu0 0
    %819 = vmatpush1.bf16.msra.mxu0 0
    %820 = vmatprep.mubr.bf16.mxu0 0
    %821 = vmatmul.mubr.bf16.gmra.mrb[0].mxu0 %v786
    %v822 = vpop.f32.mrb[0].mxu0
    %v823 = vadd.f32 %v771, %v822
    %v824 = vpop.f32.mrb[0].mxu0
    %v825 = vpop.f32.mrb[0].mxu0
    %v826 = vpop.f32.mrb[0].mxu0
    %827 = vdwg.mxu0
    %828 = vst [vmem:[#allocation7] sm:$0x3] %v823
    // Predicated region
    $region50: #{tpu_custom_call.1} parent=1 // pred_check
      _
    $region51: #{tpu_custom_call.1} parent=1 // pred_check_branch
      %830 = sbr.rel (0) target = $region53
    $region52: #{tpu_custom_call.1} parent=1 // pred_region
      %s832 = ssub.s32 32, 32
      %833 = vsyncadd [#allocation4], %s832
      %s835 = sshll.u32 [#allocation7], 4
      %s836 = int_to_ptr.vmem [resolvable:$true] %s835
      %838 = dma.vmem_to_hbm [thread:$0]  %s836, 32, %s10, [#allocation4]
    $region53: #{tpu_custom_call.1} parent=1 // pred_fallthru
      _
    // Predicated region
    $region54: #{tpu_custom_call.1} parent=1 // pred_check
      _
    $region55: #{tpu_custom_call.1} parent=1 // pred_check_branch
      %840 = sbr.rel (0) target = $region57
    $region56: #{tpu_custom_call.1} parent=1 // pred_region
      %841 = dma.done [#allocation4], 32
    $region57: #{tpu_custom_call.1} parent=1 // pred_fallthru
      _
    %842 = vsyncpa [#allocation3], 1
    %843 = vsyncpa [#allocation6], 1
    %844 = vsyncpa [#allocation4], 1

// kernel: tpu_custom_call.1
$region0: #{tpu_custom_call.1}
  #allocation0 [shape = 'u32[]', space=smem, size = 0x4, offset = 0x4, fixed_abs, tag = 'smem constant byte address 0x4 - core index']
  #allocation1 [shape = 'u32[144,128]{1,0:T(1,128)}', space=vmem, size = 0x12000, scoped, tag = 'internal scratch']
  %s0 = inlined_call_operand.vmem [shape: bf16[32,32], index: 0, kind: input, shape index: {}]
  %s1 = inlined_call_operand.hbm [shape: bf16[2,32], index: 1, kind: input, shape index: {}]
  %s2 = inlined_call_operand.vmem [shape: bf16[32,96], index: 2, kind: input, shape index: {}]
  %s3 = inlined_call_operand.hbm [shape: f32[1,96], index: 3, kind: input, shape index: {}]
  %s4 = inlined_call_operand.vmem [shape: bf16[32,128], index: 4, kind: input, shape index: {}]
  %s5 = inlined_call_operand.vmem [shape: f32[1,128], index: 5, kind: input, shape index: {}]
  %s6 = inlined_call_operand.vmem [shape: bf16[32,4], index: 6, kind: input, shape index: {}]
  %s7 = inlined_call_operand.vmem [shape: bf16[4,32], index: 7, kind: input, shape index: {}]
  %s8 = inlined_call_operand.vmem [shape: bf16[32,2], index: 8, kind: input, shape index: {}]
  %s9 = inlined_call_operand.vmem [shape: bf16[2,32], index: 9, kind: input, shape index: {}]
  %s10 = inlined_call_operand.hbm [shape: f32[2,128], index: 10, kind: output, shape index: {}]
  %s11 = sld [smem:[#allocation0]]
  $region58: #{tpu_custom_call.1} parent=0
    _
  %s13 = ssub.s32 1, %s11
  %s14 = scalar_select 0, %s13, %s11
  $region1: #{tpu_custom_call.1} parent=0
    #allocation2 [shape = 'u8[512]{0}', space=vmem, size = 0x400, scoped, tag = 'input window, operand 1, single buffered']
    #allocation3 [shape = 's32[1]{0}', space=sflag, size = 0x4, scoped, tag = 'scoped memory for tpu_custom_call.1']
    #allocation4 [shape = 's32[1]{0}', space=sflag, size = 0x4, scoped, tag = 'scoped memory for tpu_custom_call.1']
    #allocation5 [shape = 'u8[512]{0}', space=vmem, size = 0x400, scoped, tag = 'input window, operand 3, single buffered']
    #allocation6 [shape = 's32[1]{0}', space=sflag, size = 0x4, scoped, tag = 'scoped memory for tpu_custom_call.1']
    #allocation7 [shape = 'u8[1024]{0}', space=vmem, size = 0x400, scoped, tag = 'output window, operand 0, single buffered']
    %15 = vsyncpa [#allocation3], 0
    %16 = vsyncpa [#allocation6], 0
    %17 = vsyncpa [#allocation4], 0
    // Predicated region
    $region2: #{tpu_custom_call.1} parent=1 // pred_check
      _
    $region3: #{tpu_custom_call.1} parent=1 // pred_check_branch
      %19 = sbr.rel (0) target = $region5
    $region4: #{tpu_custom_call.1} parent=1 // pred_region
      _
    $region5: #{tpu_custom_call.1} parent=1 // pred_fallthru
      _
    // Predicated region
    $region6: #{tpu_custom_call.1} parent=1 // pred_check
      _
    $region7: #{tpu_custom_call.1} parent=1 // pred_check_branch
      %21 = sbr.rel (0) target = $region9
    $region8: #{tpu_custom_call.1} parent=1 // pred_region
      %s23 = ssub.s32 16, 16
      %24 = vsyncadd [#allocation3], %s23
      %s26 = sshll.u32 [#allocation2], 4
      %s27 = int_to_ptr.vmem [resolvable:$true] %s26
      %29 = dma.hbm_to_vmem [thread:$0]  %s1, 16, %s27, [#allocation3]
    $region9: #{tpu_custom_call.1} parent=1 // pred_fallthru
      _
    // Predicated region
    $region10: #{tpu_custom_call.1} parent=1 // pred_check
      _
    $region11: #{tpu_custom_call.1} parent=1 // pred_check_branch
      %31 = sbr.rel (0) target = $region13
    $region12: #{tpu_custom_call.1} parent=1 // pred_region
      _
    $region13: #{tpu_custom_call.1} parent=1 // pred_fallthru
      _
    // Predicated region
    $region14: #{tpu_custom_call.1} parent=1 // pred_check
      _
    $region15: #{tpu_custom_call.1} parent=1 // pred_check_branch
      %33 = sbr.rel (0) target = $region17
    $region16: #{tpu_custom_call.1} parent=1 // pred_region
      %s35 = ssub.s32 16, 16
      %36 = vsyncadd [#allocation6], %s35
      %s38 = sshll.u32 [#allocation5], 4
      %s39 = int_to_ptr.vmem [resolvable:$true] %s38
      %41 = dma.hbm_to_vmem [thread:$0]  %s3, 16, %s39, [#allocation6]
    $region17: #{tpu_custom_call.1} parent=1 // pred_fallthru
      _
    // Predicated region
    $region18: #{tpu_custom_call.1} parent=1 // pred_check
      _
    $region19: #{tpu_custom_call.1} parent=1 // pred_check_branch
      %43 = sbr.rel (0) target = $region21
    $region20: #{tpu_custom_call.1} parent=1 // pred_region
      _
    $region21: #{tpu_custom_call.1} parent=1 // pred_fallthru
      _
    // Predicated region
    $region22: #{tpu_custom_call.1} parent=1 // pred_check
      _
    $region23: #{tpu_custom_call.1} parent=1 // pred_check_branch
      %45 = sbr.rel (0) target = $region25
    $region24: #{tpu_custom_call.1} parent=1 // pred_region
      _
    $region25: #{tpu_custom_call.1} parent=1 // pred_fallthru
      _
    // Predicated region
    $region26: #{tpu_custom_call.1} parent=1 // pred_check
      _
    $region27: #{tpu_custom_call.1} parent=1 // pred_check_branch
      %47 = sbr.rel (0) target = $region29
    $region28: #{tpu_custom_call.1} parent=1 // pred_region
      _
    $region29: #{tpu_custom_call.1} parent=1 // pred_fallthru
      _
    // Predicated region
    $region30: #{tpu_custom_call.1} parent=1 // pred_check
      _
    $region31: #{tpu_custom_call.1} parent=1 // pred_check_branch
      %49 = sbr.rel (0) target = $region33
    $region32: #{tpu_custom_call.1} parent=1 // pred_region
      _
    $region33: #{tpu_custom_call.1} parent=1 // pred_fallthru
      _
    // Predicated region
    $region34: #{tpu_custom_call.1} parent=1 // pred_check
      _
    $region35: #{tpu_custom_call.1} parent=1 // pred_check_branch
      %51 = sbr.rel (0) target = $region37
    $region36: #{tpu_custom_call.1} parent=1 // pred_region
      _
    $region37: #{tpu_custom_call.1} parent=1 // pred_fallthru
      _
    // Predicated region
    $region38: #{tpu_custom_call.1} parent=1 // pred_check
      _
    $region39: #{tpu_custom_call.1} parent=1 // pred_check_branch
      %53 = sbr.rel (0) target = $region41
    $region40: #{tpu_custom_call.1} parent=1 // pred_region
      _
    $region41: #{tpu_custom_call.1} parent=1 // pred_fallthru
      _
    // Predicated region
    $region42: #{tpu_custom_call.1} parent=1 // pred_check
      _
    $region43: #{tpu_custom_call.1} parent=1 // pred_check_branch
      %55 = sbr.rel (0) target = $region45
    $region44: #{tpu_custom_call.1} parent=1 // pred_region
      %56 = dma.done [#allocation3], 16
    $region45: #{tpu_custom_call.1} parent=1 // pred_fallthru
      _
    // Predicated region
    $region46: #{tpu_custom_call.1} parent=1 // pred_check
      _
    $region47: #{tpu_custom_call.1} parent=1 // pred_check_branch
      %58 = sbr.rel (0) target = $region49
    $region48: #{tpu_custom_call.1} parent=1 // pred_region
      %59 = dma.done [#allocation6], 16
    $region49: #{tpu_custom_call.1} parent=1 // pred_fallthru
      _
    %v61 = vld [vmem:[%s2] sm:$0xf]
    %v62 = vld [vmem:[%s2 + $0x4] sm:$0xf]
    %v63 = vld [vmem:[%s2 + $0x8] sm:$0xf]
    %v64 = vld [vmem:[%s2 + $0xc] sm:$0xf]
    %v65 = vld [vmem:[#allocation5] sm:$0x1]
    %v66 = vld [vmem:[%s0] sm:$0xf]
    %v67 = vld [vmem:[%s0 + $0x4] sm:$0xf]
    %v68 = vld [vmem:[%s0 + $0x8] sm:$0xf]
    %v69 = vld [vmem:[%s0 + $0xc] sm:$0xf]
    %v71 = vlaneseq
    %v72 = vshrl.u32 %v71, 7
    %v73 = vsub.s32 0, %v72
    %v74 = vrot.slane %v65, %v73
    %v80 = vunpack.c.l.b16 %v66
    %v81 = vunpack.c.l.b16 %v67
    %v82 = vunpack.c.l.b16 %v68
    %v83 = vunpack.c.l.b16 %v69
    %v84 = vpack.c.b16 %v81, %v80
    %v85 = vpack.c.b16 %v83, %v82
    %v90 = vunpack.c.l.b16 %v61
    %v91 = vunpack.c.l.b16 %v62
    %v92 = vunpack.c.l.b16 %v63
    %v93 = vunpack.c.l.b16 %v64
    %v94 = vpack.c.b16 %v91, %v90
    %v95 = vpack.c.b16 %v93, %v92
    %vm98 = vcmask 261120
    %v100 = vsel %vm98, %v84, 0
    %v103 = vsel %vm98, %v85, 0
    %105 = vmatprep.subr.bf16.mxu0 0
    %106 = vmatpush1.bf16.msra.mxu0 %v94
    %107 = vmatprep.subr.bf16.mxu0 0
    %108 = vmatpush1.bf16.msra.mxu0 %v95
    %109 = vmatprep.subr.bf16.mxu0 0
    %110 = vmatpush1.bf16.msra.mxu0 0
    %111 = vmatprep.subr.bf16.mxu0 0
    %112 = vmatpush1.bf16.msra.mxu0 0
    %113 = vmatprep.subr.bf16.mxu0 0
    %114 = vmatpush1.bf16.msra.mxu0 0
    %115 = vmatprep.subr.bf16.mxu0 0
    %116 = vmatpush1.bf16.msra.mxu0 0
    %117 = vmatprep.subr.bf16.mxu0 0
    %118 = vmatpush1.bf16.msra.mxu0 0
    %119 = vmatprep.subr.bf16.mxu0 0
    %120 = vmatpush1.bf16.msra.mxu0 0
    %121 = vmatprep.subr.bf16.mxu0 0
    %122 = vmatpush1.bf16.msra.mxu0 0
    %123 = vmatprep.subr.bf16.mxu0 0
    %124 = vmatpush1.bf16.msra.mxu0 0
    %125 = vmatprep.subr.bf16.mxu0 0
    %126 = vmatpush1.bf16.msra.mxu0 0
    %127 = vmatprep.subr.bf16.mxu0 0
    %128 = vmatpush1.bf16.msra.mxu0 0
    %129 = vmatprep.subr.bf16.mxu0 0
    %130 = vmatpush1.bf16.msra.mxu0 0
    %131 = vmatprep.subr.bf16.mxu0 0
    %132 = vmatpush1.bf16.msra.mxu0 0
    %133 = vmatprep.subr.bf16.mxu0 0
    %134 = vmatpush1.bf16.msra.mxu0 0
    %135 = vmatprep.subr.bf16.mxu0 0
    %136 = vmatpush1.bf16.msra.mxu0 0
    %137 = vmatprep.mubr.bf16.mxu0 0
    %138 = vmatmul.mubr.bf16.gmra.mrb[0].mxu0 %v100
    %v139 = vpop.f32.mrb[0].mxu0
    %v140 = vadd.f32 %v74, %v139
    %v141 = vpop.f32.mrb[0].mxu0
    %v142 = vpop.f32.mrb[0].mxu0
    %v143 = vadd.f32 %v74, %v142
    %v144 = vpop.f32.mrb[0].mxu0
    %145 = vmatprep.mubr.bf16.mxu0 0
    %146 = vmatmul.mubr.bf16.gmra.mrb[0].mxu0 %v103
    %v147 = vpop.f32.mrb[0].mxu0
    %v148 = vadd.f32 %v74, %v147
    %v149 = vpop.f32.mrb[0].mxu0
    %v150 = vpop.f32.mrb[0].mxu0
    %v151 = vadd.f32 %v74, %v150
    %v152 = vpop.f32.mrb[0].mxu0
    %153 = vdwg.mxu0
    %v154 = vpack.c.bf16 %v143, %v140
    %v155 = vpack.c.bf16 %v151, %v148
    %v156 = vld [vmem:[#allocation2] sm:$0x1]
    %v158 = vsel %vm98, %v156, 0
    %160 = vmatprep.subr.bf16.mxu0 0
    %161 = vmatpush1.bf16.msra.mxu0 %v94
    %162 = vmatprep.subr.bf16.mxu0 0
    %163 = vmatpush1.bf16.msra.mxu0 %v95
    %164 = vmatprep.subr.bf16.mxu0 0
    %165 = vmatpush1.bf16.msra.mxu0 0
    %166 = vmatprep.subr.bf16.mxu0 0
    %167 = vmatpush1.bf16.msra.mxu0 0
    %168 = vmatprep.subr.bf16.mxu0 0
    %169 = vmatpush1.bf16.msra.mxu0 0
    %170 = vmatprep.subr.bf16.mxu0 0
    %171 = vmatpush1.bf16.msra.mxu0 0
    %172 = vmatprep.subr.bf16.mxu0 0
    %173 = vmatpush1.bf16.msra.mxu0 0
    %174 = vmatprep.subr.bf16.mxu0 0
    %175 = vmatpush1.bf16.msra.mxu0 0
    %176 = vmatprep.subr.bf16.mxu0 0
    %177 = vmatpush1.bf16.msra.mxu0 0
    %178 = vmatprep.subr.bf16.mxu0 0
    %179 = vmatpush1.bf16.msra.mxu0 0
    %180 = vmatprep.subr.bf16.mxu0 0
    %181 = vmatpush1.bf16.msra.mxu0 0
    %182 = vmatprep.subr.bf16.mxu0 0
    %183 = vmatpush1.bf16.msra.mxu0 0
    %184 = vmatprep.subr.bf16.mxu0 0
    %185 = vmatpush1.bf16.msra.mxu0 0
    %186 = vmatprep.subr.bf16.mxu0 0
    %187 = vmatpush1.bf16.msra.mxu0 0
    %188 = vmatprep.subr.bf16.mxu0 0
    %189 = vmatpush1.bf16.msra.mxu0 0
    %190 = vmatprep.subr.bf16.mxu0 0
    %191 = vmatpush1.bf16.msra.mxu0 0
    %192 = vmatprep.mubr.bf16.mxu0 0
    %193 = vmatmul.mubr.bf16.gmra.mrb[0].mxu0 %v158
    %v194 = vpop.f32.mrb[0].mxu0
    %v195 = vadd.f32 %v74, %v194
    %v196 = vpop.f32.mrb[0].mxu0
    %v197 = vpop.f32.mrb[0].mxu0
    %v198 = vpop.f32.mrb[0].mxu0
    %199 = vdwg.mxu0
    %v200 = vld [vmem:[%s8] sm:$0xf]
    %v201 = vld [vmem:[%s8 + $0x4] sm:$0xf]
    %v202 = vld [vmem:[%s8 + $0x8] sm:$0xf]
    %v203 = vld [vmem:[%s8 + $0xc] sm:$0xf]
    %v204 = vpack.c.bf16 %v195, %v195
    %v209 = vunpack.c.l.b16 %v200
    %v210 = vunpack.c.l.b16 %v201
    %v211 = vunpack.c.l.b16 %v202
    %v212 = vunpack.c.l.b16 %v203
    %v213 = vpack.c.b16 %v210, %v209
    %v214 = vpack.c.b16 %v212, %v211
    %216 = vrot.lane.b32.xlu0 %v204, 64
    %v217 = vpop.permute.xlu0 %216
    %vm218 = vcmask 15360
    %v220 = vsel %vm218, %v213, 0
    %v223 = vsel %vm218, %v214, 0
    %vm225 = vcmask 1040384
    %v227 = vsel %vm225, %v217, 0
    %229 = vmatprep.subr.bf16.mxu0 0
    %230 = vmatpush1.bf16.msra.mxu0 %v227
    %231 = vmatprep.subr.bf16.mxu0 0
    %232 = vmatpush1.bf16.msra.mxu0 0
    %233 = vmatprep.subr.bf16.mxu0 0
    %234 = vmatpush1.bf16.msra.mxu0 0
    %235 = vmatprep.subr.bf16.mxu0 0
    %236 = vmatpush1.bf16.msra.mxu0 0
    %237 = vmatprep.subr.bf16.mxu0 0
    %238 = vmatpush1.bf16.msra.mxu0 0
    %239 = vmatprep.subr.bf16.mxu0 0
    %240 = vmatpush1.bf16.msra.mxu0 0
    %241 = vmatprep.subr.bf16.mxu0 0
    %242 = vmatpush1.bf16.msra.mxu0 0
    %243 = vmatprep.subr.bf16.mxu0 0
    %244 = vmatpush1.bf16.msra.mxu0 0
    %245 = vmatprep.subr.bf16.mxu0 0
    %246 = vmatpush1.bf16.msra.mxu0 0
    %247 = vmatprep.subr.bf16.mxu0 0
    %248 = vmatpush1.bf16.msra.mxu0 0
    %249 = vmatprep.subr.bf16.mxu0 0
    %250 = vmatpush1.bf16.msra.mxu0 0
    %251 = vmatprep.subr.bf16.mxu0 0
    %252 = vmatpush1.bf16.msra.mxu0 0
    %253 = vmatprep.subr.bf16.mxu0 0
    %254 = vmatpush1.bf16.msra.mxu0 0
    %255 = vmatprep.subr.bf16.mxu0 0
    %256 = vmatpush1.bf16.msra.mxu0 0
    %257 = vmatprep.subr.bf16.mxu0 0
    %258 = vmatpush1.bf16.msra.mxu0 0
    %259 = vmatprep.subr.bf16.mxu0 0
    %260 = vmatpush1.bf16.msra.mxu0 0
    %261 = vmatprep.mubr.bf16.mxu0 0
    %262 = vmatmul.mubr.bf16.gmra.mrb[0].mxu0 %v220
    %v263 = vpop.f32.mrb[0].mxu0
    %v264 = vadd.f32 0.0, %v263
    %v265 = vpop.f32.mrb[0].mxu0
    %v266 = vpop.f32.mrb[0].mxu0
    %v267 = vadd.f32 0.0, %v266
    %v268 = vpop.f32.mrb[0].mxu0
    %269 = vmatprep.mubr.bf16.mxu0 0
    %270 = vmatmul.mubr.bf16.gmra.mrb[0].mxu0 %v223
    %v271 = vpop.f32.mrb[0].mxu0
    %v272 = vadd.f32 0.0, %v271
    %v273 = vpop.f32.mrb[0].mxu0
    %v274 = vpop.f32.mrb[0].mxu0
    %v275 = vadd.f32 0.0, %v274
    %v276 = vpop.f32.mrb[0].mxu0
    %277 = vdwg.mxu0
    %v278 = vpack.c.bf16 %v267, %v264
    %v279 = vpack.c.bf16 %v275, %v272
    %v280 = vmul.bf16 %v278, %v154
    %v281 = vmul.bf16 %v279, %v155
    %v282 = vld [vmem:[%s6] sm:$0xf]
    %v283 = vld [vmem:[%s6 + $0x4] sm:$0xf]
    %v284 = vld [vmem:[%s6 + $0x8] sm:$0xf]
    %v285 = vld [vmem:[%s6 + $0xc] sm:$0xf]
    %v290 = vunpack.c.l.b16 %v282
    %v291 = vunpack.c.l.b16 %v283
    %v292 = vunpack.c.l.b16 %v284
    %v293 = vunpack.c.l.b16 %v285
    %v294 = vpack.c.b16 %v291, %v290
    %v295 = vpack.c.b16 %v293, %v292
    %v299 = vsel %vm98, %v280, 0
    %v302 = vsel %vm98, %v281, 0
    %304 = vmatprep.subr.bf16.mxu0 0
    %305 = vmatpush1.bf16.msra.mxu0 %v294
    %306 = vmatprep.subr.bf16.mxu0 0
    %307 = vmatpush1.bf16.msra.mxu0 %v295
    %308 = vmatprep.subr.bf16.mxu0 0
    %309 = vmatpush1.bf16.msra.mxu0 0
    %310 = vmatprep.subr.bf16.mxu0 0
    %311 = vmatpush1.bf16.msra.mxu0 0
    %312 = vmatprep.subr.bf16.mxu0 0
    %313 = vmatpush1.bf16.msra.mxu0 0
    %314 = vmatprep.subr.bf16.mxu0 0
    %315 = vmatpush1.bf16.msra.mxu0 0
    %316 = vmatprep.subr.bf16.mxu0 0
    %317 = vmatpush1.bf16.msra.mxu0 0
    %318 = vmatprep.subr.bf16.mxu0 0
    %319 = vmatpush1.bf16.msra.mxu0 0
    %320 = vmatprep.subr.bf16.mxu0 0
    %321 = vmatpush1.bf16.msra.mxu0 0
    %322 = vmatprep.subr.bf16.mxu0 0
    %323 = vmatpush1.bf16.msra.mxu0 0
    %324 = vmatprep.subr.bf16.mxu0 0
    %325 = vmatpush1.bf16.msra.mxu0 0
    %326 = vmatprep.subr.bf16.mxu0 0
    %327 = vmatpush1.bf16.msra.mxu0 0
    %328 = vmatprep.subr.bf16.mxu0 0
    %329 = vmatpush1.bf16.msra.mxu0 0
    %330 = vmatprep.subr.bf16.mxu0 0
    %331 = vmatpush1.bf16.msra.mxu0 0
    %332 = vmatprep.subr.bf16.mxu0 0
    %333 = vmatpush1.bf16.msra.mxu0 0
    %334 = vmatprep.subr.bf16.mxu0 0
    %335 = vmatpush1.bf16.msra.mxu0 0
    %336 = vmatprep.mubr.bf16.mxu0 0
    %337 = vmatmul.mubr.bf16.gmra.mrb[0].mxu0 %v299
    %v338 = vpop.f32.mrb[0].mxu0
    %v339 = vadd.f32 0.0, %v338
    %v340 = vpop.f32.mrb[0].mxu0
    %v341 = vpop.f32.mrb[0].mxu0
    %v342 = vadd.f32 0.0, %v341
    %v343 = vpop.f32.mrb[0].mxu0
    %344 = vmatprep.mubr.bf16.mxu0 0
    %345 = vmatmul.mubr.bf16.gmra.mrb[0].mxu0 %v302
    %v346 = vpop.f32.mrb[0].mxu0
    %v347 = vadd.f32 0.0, %v346
    %v348 = vpop.f32.mrb[0].mxu0
    %v349 = vpop.f32.mrb[0].mxu0
    %v350 = vadd.f32 0.0, %v349
    %v351 = vpop.f32.mrb[0].mxu0
    %352 = vdwg.mxu0
    %354 = vrot.lane.b32.xlu0 %v195, 64
    %v355 = vpop.permute.xlu0 %354
    %v357 = vmul.f32 %v195, %v355
    %v358 = vpack.c.bf16 %v357, %v357
    %360 = vrot.lane.b32.xlu0 %v358, 64
    %v361 = vpop.permute.xlu0 %360
    %v363 = vsel %vm98, %v361, 0
    %365 = vmatprep.subr.bf16.mxu0 0
    %366 = vmatpush1.bf16.msra.mxu0 %v294
    %367 = vmatprep.subr.bf16.mxu0 0
    %368 = vmatpush1.bf16.msra.mxu0 %v295
    %369 = vmatprep.subr.bf16.mxu0 0
    %370 = vmatpush1.bf16.msra.mxu0 0
    %371 = vmatprep.subr.bf16.mxu0 0
    %372 = vmatpush1.bf16.msra.mxu0 0
    %373 = vmatprep.subr.bf16.mxu0 0
    %374 = vmatpush1.bf16.msra.mxu0 0
    %375 = vmatprep.subr.bf16.mxu0 0
    %376 = vmatpush1.bf16.msra.mxu0 0
    %377 = vmatprep.subr.bf16.mxu0 0
    %378 = vmatpush1.bf16.msra.mxu0 0
    %379 = vmatprep.subr.bf16.mxu0 0
    %380 = vmatpush1.bf16.msra.mxu0 0
    %381 = vmatprep.subr.bf16.mxu0 0
    %382 = vmatpush1.bf16.msra.mxu0 0
    %383 = vmatprep.subr.bf16.mxu0 0
    %384 = vmatpush1.bf16.msra.mxu0 0
    %385 = vmatprep.subr.bf16.mxu0 0
    %386 = vmatpush1.bf16.msra.mxu0 0
    %387 = vmatprep.subr.bf16.mxu0 0
    %388 = vmatpush1.bf16.msra.mxu0 0
    %389 = vmatprep.subr.bf16.mxu0 0
    %390 = vmatpush1.bf16.msra.mxu0 0
    %391 = vmatprep.subr.bf16.mxu0 0
    %392 = vmatpush1.bf16.msra.mxu0 0
    %393 = vmatprep.subr.bf16.mxu0 0
    %394 = vmatpush1.bf16.msra.mxu0 0
    %395 = vmatprep.subr.bf16.mxu0 0
    %396 = vmatpush1.bf16.msra.mxu0 0
    %397 = vmatprep.mubr.bf16.mxu0 0
    %398 = vmatmul.mubr.bf16.gmra.mrb[0].mxu0 %v363
    %v399 = vpop.f32.mrb[0].mxu0
    %v400 = vadd.f32 0.0, %v399
    %v401 = vpop.f32.mrb[0].mxu0
    %v402 = vpop.f32.mrb[0].mxu0
    %v403 = vpop.f32.mrb[0].mxu0
    %404 = vdwg.mxu0
    %vm405 = vcmask 31744
    %v406 = vsel %vm405, %v339, -inf
    %v407 = vsel %vm405, %v342, -inf
    %v408 = vmax.f32 %v406, %v407
    %v409 = vrot.slane %v408, 4
    %v410 = vmax.f32 %v408, %v409
    %v411 = vrot.slane %v410, 2
    %v412 = vmax.f32 %v410, %v411
    %v413 = vrot.slane %v412, 1
    %v414 = vmax.f32 %v412, %v413
    %v415 = vsel %vm405, %v347, -inf
    %v416 = vsel %vm405, %v350, -inf
    %v417 = vmax.f32 %v415, %v416
    %v418 = vrot.slane %v417, 4
    %v419 = vmax.f32 %v417, %v418
    %v420 = vrot.slane %v419, 2
    %v421 = vmax.f32 %v419, %v420
    %v422 = vrot.slane %v421, 1
    %v423 = vmax.f32 %v421, %v422
    %v425 = vrot.slane %v400, 1
    %v428 = vmax.f32 %v414, %v400
    %v429 = vmax.f32 %v423, %v425
    %v430 = vlaneseq
    %v431 = vshrl.u32 %v430, 7
    %v432 = vsub.s32 0, %v431
    %v433 = vrot.slane %v428, %v432
    %v434 = vlaneseq
    %v435 = vshrl.u32 %v434, 7
    %v436 = vsub.s32 0, %v435
    %v437 = vrot.slane %v429, %v436
    %v438 = vsub.f32 %v339, %v433
    %v439 = vsub.f32 %v342, %v433
    %v440 = vsub.f32 %v347, %v437
    %v441 = vsub.f32 %v350, %v437
    %v442 = vmul.f32 %v438, 1.442695
    %v443 = vpow.pop %v442
    %v444 = vmul.f32 %v439, 1.442695
    %v445 = vpow.pop %v444
    %v446 = vmul.f32 %v440, 1.442695
    %v447 = vpow.pop %v446
    %v448 = vmul.f32 %v441, 1.442695
    %v449 = vpow.pop %v448
    %v452 = vrot.slane %v429, 7
    %vm453 = vcmask 1041409
    %v454 = vsel %vm453, %v452, %v428
    %v456 = vsub.f32 %v400, %v454
    %v457 = vmul.f32 %v456, 1.442695
    %v458 = vpow.pop %v457
    %v459 = vsel %vm405, %v443, 0.0
    %v460 = vsel %vm405, %v445, 0.0
    %v461 = vadd.f32 %v459, %v460
    %v462 = vrot.slane %v461, 4
    %v463 = vadd.f32 %v461, %v462
    %v464 = vrot.slane %v463, 2
    %v465 = vadd.f32 %v463, %v464
    %v466 = vrot.slane %v465, 1
    %v467 = vadd.f32 %v465, %v466
    %v468 = vsel %vm405, %v447, 0.0
    %v469 = vsel %vm405, %v449, 0.0
    %v470 = vadd.f32 %v468, %v469
    %v471 = vrot.slane %v470, 4
    %v472 = vadd.f32 %v470, %v471
    %v473 = vrot.slane %v472, 2
    %v474 = vadd.f32 %v472, %v473
    %v475 = vrot.slane %v474, 1
    %v476 = vadd.f32 %v474, %v475
    %v478 = vrot.slane %v458, 1
    %v481 = vadd.f32 %v467, %v458
    %v482 = vadd.f32 %v476, %v478
    %v483 = vrcp.pop %v481
    %v484 = vrcp.pop %v482
    %v485 = vpack.c.bf16 %v445, %v443
    %v486 = vpack.c.bf16 %v449, %v447
    %v487 = vld [vmem:[%s7] sm:$0x3]
    %v489 = vsel %vm405, %v485, 0
    %v492 = vsel %vm405, %v486, 0
    %vm494 = vcmask 1041408
    %v496 = vsel %vm494, %v487, 0
    %498 = vmatprep.subr.bf16.mxu0 0
    %499 = vmatpush1.bf16.msra.mxu0 %v496
    %500 = vmatprep.subr.bf16.mxu0 0
    %501 = vmatpush1.bf16.msra.mxu0 0
    %502 = vmatprep.subr.bf16.mxu0 0
    %503 = vmatpush1.bf16.msra.mxu0 0
    %504 = vmatprep.subr.bf16.mxu0 0
    %505 = vmatpush1.bf16.msra.mxu0 0
    %506 = vmatprep.subr.bf16.mxu0 0
    %507 = vmatpush1.bf16.msra.mxu0 0
    %508 = vmatprep.subr.bf16.mxu0 0
    %509 = vmatpush1.bf16.msra.mxu0 0
    %510 = vmatprep.subr.bf16.mxu0 0
    %511 = vmatpush1.bf16.msra.mxu0 0
    %512 = vmatprep.subr.bf16.mxu0 0
    %513 = vmatpush1.bf16.msra.mxu0 0
    %514 = vmatprep.subr.bf16.mxu0 0
    %515 = vmatpush1.bf16.msra.mxu0 0
    %516 = vmatprep.subr.bf16.mxu0 0
    %517 = vmatpush1.bf16.msra.mxu0 0
    %518 = vmatprep.subr.bf16.mxu0 0
    %519 = vmatpush1.bf16.msra.mxu0 0
    %520 = vmatprep.subr.bf16.mxu0 0
    %521 = vmatpush1.bf16.msra.mxu0 0
    %522 = vmatprep.subr.bf16.mxu0 0
    %523 = vmatpush1.bf16.msra.mxu0 0
    %524 = vmatprep.subr.bf16.mxu0 0
    %525 = vmatpush1.bf16.msra.mxu0 0
    %526 = vmatprep.subr.bf16.mxu0 0
    %527 = vmatpush1.bf16.msra.mxu0 0
    %528 = vmatprep.subr.bf16.mxu0 0
    %529 = vmatpush1.bf16.msra.mxu0 0
    %530 = vmatprep.mubr.bf16.mxu0 0
    %531 = vmatmul.mubr.bf16.gmra.mrb[0].mxu0 %v489
    %v532 = vpop.f32.mrb[0].mxu0
    %v533 = vadd.f32 0.0, %v532
    %v534 = vpop.f32.mrb[0].mxu0
    %v535 = vpop.f32.mrb[0].mxu0
    %v536 = vadd.f32 0.0, %v535
    %v537 = vpop.f32.mrb[0].mxu0
    %538 = vmatprep.mubr.bf16.mxu0 0
    %539 = vmatmul.mubr.bf16.gmra.mrb[0].mxu0 %v492
    %v540 = vpop.f32.mrb[0].mxu0
    %v541 = vadd.f32 0.0, %v540
    %v542 = vpop.f32.mrb[0].mxu0
    %v543 = vpop.f32.mrb[0].mxu0
    %v544 = vadd.f32 0.0, %v543
    %v545 = vpop.f32.mrb[0].mxu0
    %546 = vdwg.mxu0
    %v547 = vpack.c.bf16 %v536, %v533
    %v548 = vpack.c.bf16 %v544, %v541
    %v549 = vld [vmem:[%s9] sm:$0x1]
    %552 = vrot.lane.b32.xlu0 %v154, 96
    %v553 = vpop.permute.xlu0 %552
    %554 = vrot.lane.b32.xlu0 %v155, 96
    %v555 = vpop.permute.xlu0 %554
    %v558 = vmul.bf16 %v547, %v553
    %v559 = vmul.bf16 %v548, %v555
    %v560 = vunpack.c.l.bf16 %v487
    %v561 = vsel %vm405, %v458, 0
    %vm563 = vcmask 1043456
    %v565 = vsel %vm563, %v560, 0
    %567 = vmatprep.subr.mxu0 0.0
    %568 = vmatpush1.msra.mxu0 %v565
    %569 = vmatprep.subr.mxu0 0.0
    %570 = vmatpush1.msra.mxu0 0.0
    %571 = vmatprep.subr.mxu0 0.0
    %572 = vmatpush1.msra.mxu0 0.0
    %573 = vmatprep.subr.mxu0 0.0
    %574 = vmatpush1.msra.mxu0 0.0
    %575 = vmatprep.subr.mxu0 0.0
    %576 = vmatpush1.msra.mxu0 0.0
    %577 = vmatprep.subr.mxu0 0.0
    %578 = vmatpush1.msra.mxu0 0.0
    %579 = vmatprep.subr.mxu0 0.0
    %580 = vmatpush1.msra.mxu0 0.0
    %581 = vmatprep.subr.mxu0 0.0
    %582 = vmatpush1.msra.mxu0 0.0
    %583 = vmatprep.subr.mxu0 0.0
    %584 = vmatpush1.msra.mxu0 0.0
    %585 = vmatprep.subr.mxu0 0.0
    %586 = vmatpush1.msra.mxu0 0.0
    %587 = vmatprep.subr.mxu0 0.0
    %588 = vmatpush1.msra.mxu0 0.0
    %589 = vmatprep.subr.mxu0 0.0
    %590 = vmatpush1.msra.mxu0 0.0
    %591 = vmatprep.subr.mxu0 0.0
    %592 = vmatpush1.msra.mxu0 0.0
    %593 = vmatprep.subr.mxu0 0.0
    %594 = vmatpush1.msra.mxu0 0.0
    %595 = vmatprep.subr.mxu0 0.0
    %596 = vmatpush1.msra.mxu0 0.0
    %597 = vmatprep.subr.mxu0 0.0
    %598 = vmatpush1.msra.mxu0 0.0
    %599 = vmatprep.subr.mxu0 0.0
    %600 = vmatpush1.msra.mxu0 0.0
    %601 = vmatprep.subr.mxu0 0.0
    %602 = vmatpush1.msra.mxu0 0.0
    %603 = vmatprep.subr.mxu0 0.0
    %604 = vmatpush1.msra.mxu0 0.0
    %605 = vmatprep.subr.mxu0 0.0
    %606 = vmatpush1.msra.mxu0 0.0
    %607 = vmatprep.subr.mxu0 0.0
    %608 = vmatpush1.msra.mxu0 0.0
    %609 = vmatprep.subr.mxu0 0.0
    %610 = vmatpush1.msra.mxu0 0.0
    %611 = vmatprep.subr.mxu0 0.0
    %612 = vmatpush1.msra.mxu0 0.0
    %613 = vmatprep.subr.mxu0 0.0
    %614 = vmatpush1.msra.mxu0 0.0
    %615 = vmatprep.subr.mxu0 0.0
    %616 = vmatpush1.msra.mxu0 0.0
    %617 = vmatprep.subr.mxu0 0.0
    %618 = vmatpush1.msra.mxu0 0.0
    %619 = vmatprep.subr.mxu0 0.0
    %620 = vmatpush1.msra.mxu0 0.0
    %621 = vmatprep.subr.mxu0 0.0
    %622 = vmatpush1.msra.mxu0 0.0
    %623 = vmatprep.subr.mxu0 0.0
    %624 = vmatpush1.msra.mxu0 0.0
    %625 = vmatprep.subr.mxu0 0.0
    %626 = vmatpush1.msra.mxu0 0.0
    %627 = vmatprep.subr.mxu0 0.0
    %628 = vmatpush1.msra.mxu0 0.0
    %629 = vmatprep.subr.mxu0 0.0
    %630 = vmatpush1.msra.mxu0 0.0
    %631 = vmatprep.mubr.f32.mxu0 0.0
    %632 = vmatmul.mubr.f32.gmra.mrb[0].mxu0 %v561
    %v633 = vpop.f32.mrb[0].mxu0
    %v634 = vadd.f32 0.0, %v633
    %v635 = vpop.f32.mrb[0].mxu0
    %636 = vdwg.mxu0
    %637 = vrot.lane.b32.xlu0 %v195, 96
    %v638 = vpop.permute.xlu0 %637
    %v640 = vmul.f32 %v634, %v638
    %v642 = vsel %vm98, %v549, 0
    %644 = vmatprep.subr.bf16.mxu0 0
    %645 = vmatpush1.bf16.msra.mxu0 %v558
    %646 = vmatprep.subr.bf16.mxu0 0
    %647 = vmatpush1.bf16.msra.mxu0 %v559
    %648 = vmatprep.subr.bf16.mxu0 0
    %649 = vmatpush1.bf16.msra.mxu0 0
    %650 = vmatprep.subr.bf16.mxu0 0
    %651 = vmatpush1.bf16.msra.mxu0 0
    %652 = vmatprep.subr.bf16.mxu0 0
    %653 = vmatpush1.bf16.msra.mxu0 0
    %654 = vmatprep.subr.bf16.mxu0 0
    %655 = vmatpush1.bf16.msra.mxu0 0
    %656 = vmatprep.subr.bf16.mxu0 0
    %657 = vmatpush1.bf16.msra.mxu0 0
    %658 = vmatprep.subr.bf16.mxu0 0
    %659 = vmatpush1.bf16.msra.mxu0 0
    %660 = vmatprep.subr.bf16.mxu0 0
    %661 = vmatpush1.bf16.msra.mxu0 0
    %662 = vmatprep.subr.bf16.mxu0 0
    %663 = vmatpush1.bf16.msra.mxu0 0
    %664 = vmatprep.subr.bf16.mxu0 0
    %665 = vmatpush1.bf16.msra.mxu0 0
    %666 = vmatprep.subr.bf16.mxu0 0
    %667 = vmatpush1.bf16.msra.mxu0 0
    %668 = vmatprep.subr.bf16.mxu0 0
    %669 = vmatpush1.bf16.msra.mxu0 0
    %670 = vmatprep.subr.bf16.mxu0 0
    %671 = vmatpush1.bf16.msra.mxu0 0
    %672 = vmatprep.subr.bf16.mxu0 0
    %673 = vmatpush1.bf16.msra.mxu0 0
    %674 = vmatprep.subr.bf16.mxu0 0
    %675 = vmatpush1.bf16.msra.mxu0 0
    %676 = vmatprep.mubr.bf16.mxu0 0
    %677 = vmatmul.mubr.bf16.gmra.mrb[0].mxu0 %v642
    %v678 = vpop.f32.mrb[0].mxu0
    %v679 = vadd.f32 %v640, %v678
    %v680 = vpop.f32.mrb[0].mxu0
    %v681 = vpop.f32.mrb[0].mxu0
    %v682 = vpop.f32.mrb[0].mxu0
    %683 = vdwg.mxu0
    %v686 = vrot.slane %v484, 7
    %v687 = vsel %vm453, %v686, %v483
    %v688 = vsel %vm405, %v687, 0
    %690 = vmatprep.subr.mxu0 0.0
    %691 = vmatpush1.msra.mxu0 %v565
    %692 = vmatprep.subr.mxu0 0.0
    %693 = vmatpush1.msra.mxu0 0.0
    %694 = vmatprep.subr.mxu0 0.0
    %695 = vmatpush1.msra.mxu0 0.0
    %696 = vmatprep.subr.mxu0 0.0
    %697 = vmatpush1.msra.mxu0 0.0
    %698 = vmatprep.subr.mxu0 0.0
    %699 = vmatpush1.msra.mxu0 0.0
    %700 = vmatprep.subr.mxu0 0.0
    %701 = vmatpush1.msra.mxu0 0.0
    %702 = vmatprep.subr.mxu0 0.0
    %703 = vmatpush1.msra.mxu0 0.0
    %704 = vmatprep.subr.mxu0 0.0
    %705 = vmatpush1.msra.mxu0 0.0
    %706 = vmatprep.subr.mxu0 0.0
    %707 = vmatpush1.msra.mxu0 0.0
    %708 = vmatprep.subr.mxu0 0.0
    %709 = vmatpush1.msra.mxu0 0.0
    %710 = vmatprep.subr.mxu0 0.0
    %711 = vmatpush1.msra.mxu0 0.0
    %712 = vmatprep.subr.mxu0 0.0
    %713 = vmatpush1.msra.mxu0 0.0
    %714 = vmatprep.subr.mxu0 0.0
    %715 = vmatpush1.msra.mxu0 0.0
    %716 = vmatprep.subr.mxu0 0.0
    %717 = vmatpush1.msra.mxu0 0.0
    %718 = vmatprep.subr.mxu0 0.0
    %719 = vmatpush1.msra.mxu0 0.0
    %720 = vmatprep.subr.mxu0 0.0
    %721 = vmatpush1.msra.mxu0 0.0
    %722 = vmatprep.subr.mxu0 0.0
    %723 = vmatpush1.msra.mxu0 0.0
    %724 = vmatprep.subr.mxu0 0.0
    %725 = vmatpush1.msra.mxu0 0.0
    %726 = vmatprep.subr.mxu0 0.0
    %727 = vmatpush1.msra.mxu0 0.0
    %728 = vmatprep.subr.mxu0 0.0
    %729 = vmatpush1.msra.mxu0 0.0
    %730 = vmatprep.subr.mxu0 0.0
    %731 = vmatpush1.msra.mxu0 0.0
    %732 = vmatprep.subr.mxu0 0.0
    %733 = vmatpush1.msra.mxu0 0.0
    %734 = vmatprep.subr.mxu0 0.0
    %735 = vmatpush1.msra.mxu0 0.0
    %736 = vmatprep.subr.mxu0 0.0
    %737 = vmatpush1.msra.mxu0 0.0
    %738 = vmatprep.subr.mxu0 0.0
    %739 = vmatpush1.msra.mxu0 0.0
    %740 = vmatprep.subr.mxu0 0.0
    %741 = vmatpush1.msra.mxu0 0.0
    %742 = vmatprep.subr.mxu0 0.0
    %743 = vmatpush1.msra.mxu0 0.0
    %744 = vmatprep.subr.mxu0 0.0
    %745 = vmatpush1.msra.mxu0 0.0
    %746 = vmatprep.subr.mxu0 0.0
    %747 = vmatpush1.msra.mxu0 0.0
    %748 = vmatprep.subr.mxu0 0.0
    %749 = vmatpush1.msra.mxu0 0.0
    %750 = vmatprep.subr.mxu0 0.0
    %751 = vmatpush1.msra.mxu0 0.0
    %752 = vmatprep.subr.mxu0 0.0
    %753 = vmatpush1.msra.mxu0 0.0
    %754 = vmatprep.mubr.f32.mxu0 0.0
    %755 = vmatmul.mubr.f32.gmra.mrb[0].mxu0 %v688
    %v756 = vpop.f32.mrb[0].mxu0
    %v757 = vadd.f32 0.0, %v756
    %v758 = vpop.f32.mrb[0].mxu0
    %759 = vdwg.mxu0
    %v760 = vmul.f32 %v679, %v757
    %v761 = vpack.c.bf16 %v760, %v760
    %v762 = vld [vmem:[%s4] sm:$0xf]
    %v763 = vld [vmem:[%s4 + $0x4] sm:$0xf]
    %v764 = vld [vmem:[%s4 + $0x8] sm:$0xf]
    %v765 = vld [vmem:[%s4 + $0xc] sm:$0xf]
    %v766 = vld [vmem:[%s5] sm:$0x1]
    %v768 = vlaneseq
    %v769 = vshrl.u32 %v768, 7
    %v770 = vsub.s32 0, %v769
    %v771 = vrot.slane %v766, %v770
    %v777 = vunpack.c.l.b16 %v762
    %v778 = vunpack.c.l.b16 %v763
    %v779 = vunpack.c.l.b16 %v764
    %v780 = vunpack.c.l.b16 %v765
    %v781 = vpack.c.b16 %v778, %v777
    %v782 = vpack.c.b16 %v780, %v779
    %v786 = vsel %vm98, %v761, 0
    %788 = vmatprep.subr.bf16.mxu0 0
    %789 = vmatpush1.bf16.msra.mxu0 %v781
    %790 = vmatprep.subr.bf16.mxu0 0
    %791 = vmatpush1.bf16.msra.mxu0 %v782
    %792 = vmatprep.subr.bf16.mxu0 0
    %793 = vmatpush1.bf16.msra.mxu0 0
    %794 = vmatprep.subr.bf16.mxu0 0
    %795 = vmatpush1.bf16.msra.mxu0 0
    %796 = vmatprep.subr.bf16.mxu0 0
    %797 = vmatpush1.bf16.msra.mxu0 0
    %798 = vmatprep.subr.bf16.mxu0 0
    %799 = vmatpush1.bf16.msra.mxu0 0
    %800 = vmatprep.subr.bf16.mxu0 0
    %801 = vmatpush1.bf16.msra.mxu0 0
    %802 = vmatprep.subr.bf16.mxu0 0
    %803 = vmatpush1.bf16.msra.mxu0 0
    %804 = vmatprep.subr.bf16.mxu0 0
    %805 = vmatpush1.bf16.msra.mxu0 0
    %806 = vmatprep.subr.bf16.mxu0 0
    %807 = vmatpush1.bf16.msra.mxu0 0
    %808 = vmatprep.subr.bf16.mxu0 0
    %809 = vmatpush1.bf16.msra.mxu0 0
    %810 = vmatprep.subr.bf16.mxu0 0
    %811 = vmatpush1.bf16.msra.mxu0 0
    %812 = vmatprep.subr.bf16.mxu0 0
    %813 = vmatpush1.bf16.msra.mxu0 0
    %814 = vmatprep.subr.bf16.mxu0 0
    %815 = vmatpush1.bf16.msra.mxu0 0
    %816 = vmatprep.subr.bf16.mxu0 0
    %817 = vmatpush1.bf16.msra.mxu0 0
    %818 = vmatprep.subr.bf16.mxu0 0
    %819 = vmatpush1.bf16.msra.mxu0 0
    %820 = vmatprep.mubr.bf16.mxu0 0
    %821 = vmatmul.mubr.bf16.gmra.mrb[0].mxu0 %v786
    %v822 = vpop.f32.mrb[0].mxu0
    %v823 = vadd.f32 %v771, %v822
    %v824 = vpop.f32.mrb[0].mxu0
    %v825 = vpop.f32.mrb[0].mxu0
    %v826 = vpop.f32.mrb[0].mxu0
    %827 = vdwg.mxu0
    %828 = vst [vmem:[#allocation7] sm:$0x3] %v823
    // Predicated region
    $region50: #{tpu_custom_call.1} parent=1 // pred_check
      _
    $region51: #{tpu_custom_call.1} parent=1 // pred_check_branch
      %830 = sbr.rel (0) target = $region53
    $region52: #{tpu_custom_call.1} parent=1 // pred_region
      %s832 = ssub.s32 32, 32
      %833 = vsyncadd [#allocation4], %s832
      %s835 = sshll.u32 [#allocation7], 4
      %s836 = int_to_ptr.vmem [resolvable:$true] %s835
      %838 = dma.vmem_to_hbm [thread:$0]  %s836, 32, %s10, [#allocation4]
    $region53: #{tpu_custom_call.1} parent=1 // pred_fallthru
      _
    // Predicated region
    $region54: #{tpu_custom_call.1} parent=1 // pred_check
      _
    $region55: #{tpu_custom_call.1} parent=1 // pred_check_branch
      %840 = sbr.rel (0) target = $region57
    $region56: #{tpu_custom_call.1} parent=1 // pred_region
      %841 = dma.done [#allocation4], 32
    $region57: #{tpu_custom_call.1} parent=1 // pred_fallthru
      _
    %842 = vsyncpa [#allocation3], 1
    %843 = vsyncpa [#allocation6], 1
    %844 = vsyncpa [#allocation4], 1

</llo_original>
